<compile_context>
chip_gen: v6e
topology: v6e:2x2x1
jax: 0.10.0
libtpu: 0.0.40
codegen_flags: <defaults>
</compile_context>

<pallas_src>
import functools

import jax
import jax.numpy as jnp
from jax import lax
from jax.experimental import pallas as pl
from jax.experimental.pallas import tpu as pltpu


def _round_up(x, m):
    return ((x + m - 1) // m) * m


def _vmem_limit_bytes():
    # Generation-aware VMEM budget: ~3/4 of physical VMEM
    # (v5e/v6e: ~96 MiB of 128, v7x: ~48 MiB of 64), clamped to [32, 100] MiB.
    try:
        cap = int(pltpu.get_tpu_info().vmem_capacity_bytes)
    except Exception:  # pragma: no cover - conservative fallback
        cap = 64 * 1024 * 1024
    return max(32 * 1024 * 1024, min(cap * 3 // 4, 100 * 1024 * 1024))


# ----------------------------------------------------------------------------
# Fused encoder kernel: grid = (layer, pass, node_row_tile)
#   pass 0: GINConv + MLP -> z tile, accumulate masked BN sum / sumsq
#   pass 1: BN apply -> h tile, ResidualVQ, pooled-sum & commit-loss accum
# ----------------------------------------------------------------------------
def _encoder_kernel(adj_ref, x_ref, pool_ref, w1_ref, w2_ref, vec_ref, cb_ref,
                    xs_ref, xpool_ref, ids_ref, loss_ref,
                    h_ref, z_ref, stat_ref, *,
                    n_real, num_code, commitment_weight):
    l = pl.program_id(0)      # layer
    p = pl.program_id(1)      # pass (0 / 1)
    t = pl.program_id(2)      # node row tile

    tm = adj_ref.shape[0]
    dim = w2_ref.shape[-1]
    num_res = cb_ref.shape[1]
    c_pad = cb_ref.shape[2]

    row0 = pl.multiple_of(t * tm, tm)
    # validity mask for padded node rows (excluded from BN stats & loss)
    row_ids = row0 + lax.broadcasted_iota(jnp.int32, (tm, 1), 0)
    row_valid = (row_ids < n_real).astype(jnp.float32)            # (tm, 1)
    inv_n = 1.0 / float(n_real)

    # ---- one-time init (very first grid step): seed resident h with x ----
    @pl.when((l == 0) & (p == 0) & (t == 0))
    def _():
        h_ref[...] = x_ref[...]
        loss_ref[0] = 0.0

    # ---- per-layer init: zero BN-stat and pooled-sum accumulators ----
    @pl.when((p == 0) & (t == 0))
    def _():
        stat_ref[...] = jnp.zeros_like(stat_ref)
        xpool_ref[...] = jnp.zeros_like(xpool_ref)

    # ====================== pass 0: conv + MLP + BN stats ==================
    @pl.when(p == 0)
    def _pass0():
        # int8 (A+I) row tile -> bf16 right before the MXU dot.
        adj_t = adj_ref[...].astype(jnp.float32).astype(jnp.bfloat16)
        agg = jnp.dot(adj_t, h_ref[...], preferred_element_type=jnp.float32)
        z = jnp.dot(agg.astype(jnp.bfloat16), w1_ref[0],
                    preferred_element_type=jnp.float32)
        z = z + vec_ref[0, 0:1, :]                                 # b1
        z = jnp.maximum(z, 0.0)
        z = jnp.dot(z.astype(jnp.bfloat16), w2_ref[0],
                    preferred_element_type=jnp.float32)
        z = z + vec_ref[0, 1:2, :]                                 # b2
        z = jnp.maximum(z, 0.0)                                    # outer F.relu
        z_ref[pl.ds(row0, tm), :] = z
        zm = z * row_valid
        stat_ref[0:1, :] += jnp.sum(zm, axis=0, keepdims=True)     # sum(z)
        stat_ref[1:2, :] += jnp.sum(zm * z, axis=0, keepdims=True)  # sum(z^2)
        # Keep the (revisited) per-tile output buffers deterministic; the
        # real values are written in pass 1 and flushed last.
        xs_ref[0] = z
        ids_ref[0] = jnp.zeros((tm, num_res), jnp.int32)

    # ====================== pass 1: BN apply + RVQ + pool ==================
    @pl.when(p == 1)
    def _pass1():
        z = z_ref[pl.ds(row0, tm), :]
        mean = stat_ref[0:1, :] * inv_n
        var = stat_ref[1:2, :] * inv_n - mean * mean
        h = (z - mean) * lax.rsqrt(var + 1e-5)
        h = h * vec_ref[0, 2:3, :] + vec_ref[0, 3:4, :]            # gamma, beta

        xs_ref[0] = h                                              # layer output
        h_ref[pl.ds(row0, tm), 0:dim] = h.astype(h_ref.dtype)      # next layer in
        # global_add_pool partial sums for this tile / layer
        xpool_ref[0] += jnp.dot(pool_ref[...], h.astype(jnp.bfloat16),
                                preferred_element_type=jnp.float32)

        # ---- ResidualVectorQuant: num_res cosine-sim stages ----
        lane_iota = lax.broadcasted_iota(jnp.int32, (1, c_pad), 1)
        code_valid = lane_iota < num_code
        residual = h
        loss_acc = jnp.zeros((), jnp.float32)
        id_cols = []
        for r in range(num_res):
            x_n = residual * lax.rsqrt(
                jnp.sum(residual * residual, axis=-1, keepdims=True) + 1e-12)
            cb = cb_ref[0, r]                    # (c_pad, dim) bf16, pre-L2-normalized
            sim = lax.dot_general(x_n.astype(jnp.bfloat16), cb,
                                  (((1,), (1,)), ((), ())),
                                  preferred_element_type=jnp.float32)
            sim = jnp.where(code_valid, sim, -1e30)                # mask pad codes
            max_sim = jnp.max(sim, axis=-1, keepdims=True)
            idx = jnp.min(jnp.where(sim >= max_sim, lane_iota, c_pad),
                          axis=-1, keepdims=True)                  # first argmax
            id_cols.append(idx)
            onehot = (lane_iota == idx).astype(jnp.bfloat16)
            q = jnp.dot(onehot, cb, preferred_element_type=jnp.float32)
            diff = (q - residual) * row_valid
            loss_acc = loss_acc + jnp.sum(diff * diff)
            residual = residual - q
        ids_ref[0] = jnp.concatenate(id_cols, axis=1)
        loss_ref[0] += commitment_weight * loss_acc * (inv_n / float(dim))


# ----------------------------------------------------------------------------
# Parameters & forward wrapper (all heavy work in one pallas_call)
# ----------------------------------------------------------------------------
def init_params(key, num_features, dim, num_gc_layers, num_code, num_res=3):
    params = []
    for i in range(num_gc_layers):
        in_dim = num_features if i == 0 else dim
        key, k1, k2, k3 = jax.random.split(key, 4)
        params.append(dict(
            w1=0.1 * jax.random.normal(k1, (in_dim, dim), jnp.float32),
            b1=jnp.zeros((dim,), jnp.float32),
            w2=0.1 * jax.random.normal(k2, (dim, dim), jnp.float32),
            b2=jnp.zeros((dim,), jnp.float32),
            gamma=jnp.ones((dim,), jnp.float32),
            beta=jnp.zeros((dim,), jnp.float32),
            codebook=jax.random.normal(k3, (num_res, num_code, dim),
                                       jnp.float32),
        ))
    return params


def encoder_forward(x, edge_index, batch, params, num_graphs,
                    commitment_weight=0.25, tile_rows=256):
    n, num_features = x.shape
    num_layers = len(params)
    dim = params[0]["w2"].shape[1]
    num_res, num_code, _ = params[0]["codebook"].shape
    in_max = max(num_features, dim)
    c_pad = _round_up(num_code, 128)            # lane-pad codebook to 128 mult

    # Node-row tiling: adj streamed in (tm, n_pad) int8 tiles, rest resident.
    if n <= tile_rows:
        n_pad = _round_up(n, 32)
        tm = n_pad
    else:
        n_pad = _round_up(n, tile_rows)
        tm = tile_rows
    n_tiles = n_pad // tm

    # ---- dense (A + I) via one-hot matmul (no XLA scatter-add), int8 ----
    src_oh = jax.nn.one_hot(edge_index[0], n_pad, dtype=jnp.float32)   # (E, Np)
    dst_oh = jax.nn.one_hot(edge_index[1], n_pad, dtype=jnp.float32)
    adj = dst_oh.T @ src_oh + jnp.eye(n_pad, dtype=jnp.float32)
    adj_i8 = jnp.clip(jnp.round(adj), 0.0, 127.0).astype(jnp.int8)

    # graph-assignment pooling matrix (zero columns for padded nodes)
    pool_mat = jnp.pad(jax.nn.one_hot(batch, num_graphs, dtype=jnp.float32).T,
                       ((0, 0), (0, n_pad - n))).astype(jnp.bfloat16)

    # input features padded to (n_pad, in_max); bf16 (MXU operand, resident h)
    x_pad = jnp.pad(x.astype(jnp.float32),
                    ((0, n_pad - n),
                     (0, in_max - num_features))).astype(jnp.bfloat16)

    # stacked per-layer weights (pre-cast / pre-padded once in the wrapper)
    w1_all = jnp.stack([
        jnp.pad(p["w1"], ((0, in_max - p["w1"].shape[0]), (0, 0)))
        for p in params], axis=0).astype(jnp.bfloat16)        # (L, in_max, dim)
    w2_all = jnp.stack([p["w2"] for p in params],
                       axis=0).astype(jnp.bfloat16)           # (L, dim, dim)
    vecs = jnp.stack(
        [jnp.stack([p["b1"], p["b2"], p["gamma"], p["beta"]], axis=0)
         for p in params], axis=0).astype(jnp.float32)        # (L, 4, dim)

    # pre-normalized (cosine-sim) codebooks, lane-padded, pre-cast to bf16
    cb_list = []
    for p in params:
        cb = p["codebook"].astype(jnp.float32)                # (R, num_code, d)
        cb = cb * lax.rsqrt(jnp.sum(cb * cb, axis=-1, keepdims=True) + 1e-12)
        cb_list.append(jnp.pad(cb, ((0, 0), (0, c_pad - num_code), (0, 0))))
    cb_all = jnp.stack(cb_list, axis=0).astype(jnp.bfloat16)  # (L, R, c_pad, d)

    kernel = functools.partial(
        _encoder_kernel, n_real=n, num_code=num_code,
        commitment_weight=commitment_weight)

    grid = (num_layers, 2, n_tiles)
    in_specs = [
        # adj row tiles streamed during pass 0 only (constant block in pass 1)
        pl.BlockSpec((tm, n_pad), lambda li, pi, ti: (ti * (1 - pi), 0)),
        pl.BlockSpec((n_pad, in_max), lambda li, pi, ti: (0, 0)),          # x
        pl.BlockSpec((num_graphs, tm), lambda li, pi, ti: (0, ti * pi)),   # pool
        pl.BlockSpec((1, in_max, dim), lambda li, pi, ti: (li, 0, 0)),     # w1
        pl.BlockSpec((1, dim, dim), lambda li, pi, ti: (li, 0, 0)),        # w2
        pl.BlockSpec((1, 4, dim), lambda li, pi, ti: (li, 0, 0)),          # vecs
        pl.BlockSpec((1, num_res, c_pad, dim),
                     lambda li, pi, ti: (li, 0, 0, 0)),                    # cb
    ]
    out_specs = (
        pl.BlockSpec((1, tm, dim), lambda li, pi, ti: (li, ti, 0)),        # xs
        pl.BlockSpec((1, num_graphs, dim), lambda li, pi, ti: (li, 0, 0)),  # xpool
        pl.BlockSpec((1, tm, num_res), lambda li, pi, ti: (li, ti, 0)),    # ids
        pl.BlockSpec(memory_space=pltpu.MemorySpace.SMEM),                 # loss
    )
    out_shape = (
        jax.ShapeDtypeStruct((num_layers, n_pad, dim), jnp.float32),
        jax.ShapeDtypeStruct((num_layers, num_graphs, dim), jnp.float32),
        jax.ShapeDtypeStruct((num_layers, n_pad, num_res), jnp.int32),
        jax.ShapeDtypeStruct((1,), jnp.float32),
    )
    scratch_shapes = [
        pltpu.VMEM((n_pad, in_max), jnp.bfloat16),   # resident h (layer input)
        pltpu.VMEM((n_pad, dim), jnp.float32),       # pre-BN activations z
        pltpu.VMEM((2, dim), jnp.float32),           # BN sum / sum-of-squares
    ]

    xs_l, xpool_l, ids_l, loss = pl.pallas_call(
        kernel,
        grid=grid,
        in_specs=in_specs,
        out_specs=out_specs,
        out_shape=out_shape,
        scratch_shapes=scratch_shapes,
        compiler_params=pltpu.CompilerParams(
            dimension_semantics=("arbitrary", "arbitrary", "arbitrary"),
            vmem_limit_bytes=_vmem_limit_bytes()),
    )(adj_i8, x_pad, pool_mat, w1_all, w2_all, vecs, cb_all)

    # Rearrange to the torch layouts (cheap layout plumbing outside the kernel)
    xs_cat = xs_l.transpose(1, 0, 2).reshape(n_pad, num_layers * dim)[:n]
    xpool_cat = xpool_l.transpose(1, 0, 2).reshape(num_graphs,
                                                   num_layers * dim)
    ids_cat = ids_l.transpose(1, 0, 2).reshape(n_pad,
                                               num_layers * num_res)[:n]
    return xpool_cat, xs_cat, loss[0], ids_cat


if __name__ == "__main__":
    NUM_FEATURES = 16
    DIM = 32
    NUM_GC_LAYERS = 3
    NUM_CODE = 16
    NUM_RES = 3
    N_NODES = 32
    N_GRAPHS = 4
    N_EDGES = 64

    key = jax.random.PRNGKey(0)
    k_x, k_src, k_dst, k_par = jax.random.split(key, 4)

    x = jax.random.normal(k_x, (N_NODES, NUM_FEATURES), jnp.float32)
    src = jax.random.randint(k_src, (N_EDGES,), 0, N_NODES, jnp.int32)
    dst = jax.random.randint(k_dst, (N_EDGES,), 0, N_NODES, jnp.int32)
    edge_index = jnp.stack([src, dst], axis=0)                      # (2, E)
    batch = jnp.repeat(jnp.arange(N_GRAPHS, dtype=jnp.int32),
                       N_NODES // N_GRAPHS)                         # (N,)

    params = init_params(k_par, NUM_FEATURES, DIM, NUM_GC_LAYERS, NUM_CODE,
                         num_res=NUM_RES)

    x_pooled, xs_cat, commit_loss, id_cat = encoder_forward(
        x, edge_index, batch, params, N_GRAPHS)

    jax.block_until_ready((x_pooled, xs_cat, commit_loss, id_cat))
    assert x_pooled.shape == (N_GRAPHS, DIM * NUM_GC_LAYERS)
    assert xs_cat.shape == (N_NODES, DIM * NUM_GC_LAYERS)
    assert id_cat.shape == (N_NODES, NUM_RES * NUM_GC_LAYERS)
    assert commit_loss.shape == ()
    print("KERNEL_OK")
</pallas_src>

<mosaic_0001>
module attributes {stable_mosaic.version = 11 : i64} {
  func.func @_encoder_kernel(%arg0: i32, %arg1: i32, %arg2: i32, %arg3: memref<32x32xi8, #tpu.memory_space<vmem>>, %arg4: memref<32x32xbf16, #tpu.memory_space<vmem>>, %arg5: memref<4x32xbf16, #tpu.memory_space<vmem>>, %arg6: memref<1x32x32xbf16, #tpu.memory_space<vmem>>, %arg7: memref<1x32x32xbf16, #tpu.memory_space<vmem>>, %arg8: memref<1x4x32xf32, #tpu.memory_space<vmem>>, %arg9: memref<1x3x128x32xbf16, #tpu.memory_space<vmem>>, %arg10: memref<1x32x32xf32, #tpu.memory_space<vmem>>, %arg11: memref<1x4x32xf32, #tpu.memory_space<vmem>>, %arg12: memref<1x32x3xi32, #tpu.memory_space<vmem>>, %arg13: memref<1xf32, #tpu.memory_space<smem>>, %arg14: memref<32x32xbf16, #tpu.memory_space<vmem>>, %arg15: memref<32x32xf32, #tpu.memory_space<vmem>>, %arg16: memref<2x32xf32, #tpu.memory_space<vmem>>) attributes {dimension_semantics = [#tpu.dimension_semantics<arbitrary>, #tpu.dimension_semantics<arbitrary>, #tpu.dimension_semantics<arbitrary>], iteration_bounds = array<i64: 3, 2, 1>, scalar_prefetch = 0 : i64, scratch_operands = 3 : i64, tpu.core_type = #tpu.core_type<tc>, window_params = [{transform_indices = @transform_0, window_bounds = array<i64: 32, 32>}, {pipeline_mode = #tpu.pipeline_mode<synchronous>, transform_indices = @transform_1, window_bounds = array<i64: 32, 32>}, {transform_indices = @transform_2, window_bounds = array<i64: 4, 32>}, {transform_indices = @transform_3, window_bounds = array<i64: 1, 32, 32>}, {transform_indices = @transform_4, window_bounds = array<i64: 1, 32, 32>}, {transform_indices = @transform_5, window_bounds = array<i64: 1, 4, 32>}, {transform_indices = @transform_6, window_bounds = array<i64: 1, 3, 128, 32>}, {transform_indices = @transform_7, window_bounds = array<i64: 1, 32, 32>}, {transform_indices = @transform_8, window_bounds = array<i64: 1, 4, 32>}, {transform_indices = @transform_9, window_bounds = array<i64: 1, 32, 3>}, {transform_indices = @transform_10, window_bounds = array<i64: 1>}]} {
    %c32_i32 = arith.constant 32 : i32
    %0 = arith.muli %arg2, %c32_i32 : i32
    %1 = tpu.assume_multiple %0, 32 : i32
    %2 = tpu.iota {dimensions = array<i32: 0>} : vector<32x1xi32>
    %3 = vector.broadcast %1 : i32 to vector<32x1xi32>
    %4 = arith.addi %3, %2 : vector<32x1xi32>
    %c32_i32_0 = arith.constant 32 : i32
    %5 = vector.broadcast %c32_i32_0 : i32 to vector<32x1xi32>
    %6 = arith.cmpi slt, %4, %5 : vector<32x1xi32>
    %7 = arith.extui %6 : vector<32x1xi1> to vector<32x1xi32>
    %8 = arith.sitofp %7 : vector<32x1xi32> to vector<32x1xf32>
    %c0_i32 = arith.constant 0 : i32
    %9 = arith.cmpi eq, %arg0, %c0_i32 : i32
    %c0_i32_1 = arith.constant 0 : i32
    %10 = arith.cmpi eq, %arg1, %c0_i32_1 : i32
    %11 = arith.andi %9, %10 : i1
    %c0_i32_2 = arith.constant 0 : i32
    %12 = arith.cmpi eq, %arg2, %c0_i32_2 : i32
    %13 = arith.andi %11, %12 : i1
    %14 = arith.extui %13 : i1 to i32
    %c0_i32_3 = arith.constant 0 : i32
    %15 = arith.cmpi ne, %14, %c0_i32_3 : i32
    scf.if %15 {
      %c0 = arith.constant 0 : index
      %c0_10 = arith.constant 0 : index
      %27 = vector.load %arg4[%c0, %c0_10] : memref<32x32xbf16, #tpu.memory_space<vmem>>, vector<32x32xbf16>
      %c0_11 = arith.constant 0 : index
      %c0_12 = arith.constant 0 : index
      %28 = vector.load %arg14[%c0_11, %c0_12] : memref<32x32xbf16, #tpu.memory_space<vmem>>, vector<32x32xbf16>
      tpu.vector_store %arg14[%c0_11, %c0_12], %27 {strides = array<i32>} : memref<32x32xbf16, #tpu.memory_space<vmem>>, vector<32x32xbf16>,
      %cst = arith.constant 0.000000e+00 : f32
      %c0_13 = arith.constant 0 : index
      %29 = memref.load %arg13[%c0_13] : memref<1xf32, #tpu.memory_space<smem>>
      memref.store %cst, %arg13[%c0_13] : memref<1xf32, #tpu.memory_space<smem>>
    } else {
    }
    %c0_i32_4 = arith.constant 0 : i32
    %16 = arith.cmpi eq, %arg1, %c0_i32_4 : i32
    %c0_i32_5 = arith.constant 0 : i32
    %17 = arith.cmpi eq, %arg2, %c0_i32_5 : i32
    %18 = arith.andi %16, %17 : i1
    %19 = arith.extui %18 : i1 to i32
    %c0_i32_6 = arith.constant 0 : i32
    %20 = arith.cmpi ne, %19, %c0_i32_6 : i32
    scf.if %20 {
      %cst = arith.constant 0.000000e+00 : f32
      %27 = vector.broadcast %cst : f32 to vector<2x32xf32>
      %c0 = arith.constant 0 : index
      %c0_10 = arith.constant 0 : index
      %28 = vector.load %arg16[%c0, %c0_10] : memref<2x32xf32, #tpu.memory_space<vmem>>, vector<2x32xf32>
      tpu.vector_store %arg16[%c0, %c0_10], %27 {strides = array<i32>} : memref<2x32xf32, #tpu.memory_space<vmem>>, vector<2x32xf32>,
      %cst_11 = arith.constant 0.000000e+00 : f32
      %29 = vector.broadcast %cst_11 : f32 to vector<1x4x32xf32>
      %c0_12 = arith.constant 0 : index
      %c0_13 = arith.constant 0 : index
      %c0_14 = arith.constant 0 : index
      %30 = vector.load %arg11[%c0_12, %c0_13, %c0_14] : memref<1x4x32xf32, #tpu.memory_space<vmem>>, vector<1x4x32xf32>
      tpu.vector_store %arg11[%c0_12, %c0_13, %c0_14], %29 {strides = array<i32>} : memref<1x4x32xf32, #tpu.memory_space<vmem>>, vector<1x4x32xf32>,
    } else {
    }
    %c0_i32_7 = arith.constant 0 : i32
    %21 = arith.cmpi eq, %arg1, %c0_i32_7 : i32
    %22 = arith.extui %21 : i1 to i32
    %c0_i32_8 = arith.constant 0 : i32
    %23 = arith.cmpi ne, %22, %c0_i32_8 : i32
    scf.if %23 {
      %c0 = arith.constant 0 : index
      %c0_10 = arith.constant 0 : index
      %27 = vector.load %arg3[%c0, %c0_10] : memref<32x32xi8, #tpu.memory_space<vmem>>, vector<32x32xi8>
      %28 = arith.sitofp %27 : vector<32x32xi8> to vector<32x32xf32>
      %29 = arith.truncf %28 : vector<32x32xf32> to vector<32x32xbf16>
      %c0_11 = arith.constant 0 : index
      %c0_12 = arith.constant 0 : index
      %30 = vector.load %arg14[%c0_11, %c0_12] : memref<32x32xbf16, #tpu.memory_space<vmem>>, vector<32x32xbf16>
      %cst = arith.constant dense<0.000000e+00> : vector<32x32xf32>
      %31 = tpu.matmul %29, %30, %cst {dimension_numbers = #tpu.dot_dimension_numbers<[1], [0], [0], [1], [0, 0, 1, 1], [], []>} : vector<32x32xbf16>, vector<32x32xbf16>, vector<32x32xf32> -> vector<32x32xf32>
      %32 = arith.truncf %31 : vector<32x32xf32> to vector<32x32xbf16>
      %c0_13 = arith.constant 0 : index
      %c0_14 = arith.constant 0 : index
      %c0_15 = arith.constant 0 : index
      %33 = vector.load %arg6[%c0_13, %c0_14, %c0_15] : memref<1x32x32xbf16, #tpu.memory_space<vmem>>, vector<1x32x32xbf16>
      %34 = vector.shape_cast %33 : vector<1x32x32xbf16> to vector<32x32xbf16>
      %cst_16 = arith.constant dense<0.000000e+00> : vector<32x32xf32>
      %35 = tpu.matmul %32, %34, %cst_16 {dimension_numbers = #tpu.dot_dimension_numbers<[1], [0], [0], [1], [0, 0, 1, 1], [], []>} : vector<32x32xbf16>, vector<32x32xbf16>, vector<32x32xf32> -> vector<32x32xf32>
      %c0_17 = arith.constant 0 : index
      %c0_18 = arith.constant 0 : index
      %c0_19 = arith.constant 0 : index
      %36 = vector.load %arg8[%c0_17, %c0_18, %c0_19] : memref<1x4x32xf32, #tpu.memory_space<vmem>>, vector<1x1x32xf32>
      %37 = vector.shape_cast %36 : vector<1x1x32xf32> to vector<1x32xf32>
      %38 = vector.broadcast %37 : vector<1x32xf32> to vector<32x32xf32>
      %39 = arith.addf %35, %38 : vector<32x32xf32>
      %cst_20 = arith.constant 0.000000e+00 : f32
      %40 = vector.broadcast %cst_20 : f32 to vector<32x32xf32>
      %41 = arith.maximumf %39, %40 : vector<32x32xf32>
      %42 = arith.truncf %41 : vector<32x32xf32> to vector<32x32xbf16>
      %c0_21 = arith.constant 0 : index
      %c0_22 = arith.constant 0 : index
      %c0_23 = arith.constant 0 : index
      %43 = vector.load %arg7[%c0_21, %c0_22, %c0_23] : memref<1x32x32xbf16, #tpu.memory_space<vmem>>, vector<1x32x32xbf16>
      %44 = vector.shape_cast %43 : vector<1x32x32xbf16> to vector<32x32xbf16>
      %cst_24 = arith.constant dense<0.000000e+00> : vector<32x32xf32>
      %45 = tpu.matmul %42, %44, %cst_24 {dimension_numbers = #tpu.dot_dimension_numbers<[1], [0], [0], [1], [0, 0, 1, 1], [], []>} : vector<32x32xbf16>, vector<32x32xbf16>, vector<32x32xf32> -> vector<32x32xf32>
      %c0_25 = arith.constant 0 : index
      %c1 = arith.constant 1 : index
      %c0_26 = arith.constant 0 : index
      %46 = vector.load %arg8[%c0_25, %c1, %c0_26] : memref<1x4x32xf32, #tpu.memory_space<vmem>>, vector<1x1x32xf32>
      %47 = vector.shape_cast %46 : vector<1x1x32xf32> to vector<1x32xf32>
      %48 = vector.broadcast %47 : vector<1x32xf32> to vector<32x32xf32>
      %49 = arith.addf %45, %48 : vector<32x32xf32>
      %cst_27 = arith.constant 0.000000e+00 : f32
      %50 = vector.broadcast %cst_27 : f32 to vector<32x32xf32>
      %51 = arith.maximumf %49, %50 : vector<32x32xf32>
      %52 = arith.index_cast %1 : i32 to index
      %c0_28 = arith.constant 0 : index
      %53 = vector.load %arg15[%52, %c0_28] : memref<32x32xf32, #tpu.memory_space<vmem>>, vector<32x32xf32>
      tpu.vector_store %arg15[%52, %c0_28], %51 {strides = array<i32>} : memref<32x32xf32, #tpu.memory_space<vmem>>, vector<32x32xf32>,
      %54 = vector.broadcast %8 : vector<32x1xf32> to vector<32x32xf32>
      %55 = arith.mulf %51, %54 : vector<32x32xf32>
      %c0_29 = arith.constant 0 : index
      %c0_30 = arith.constant 0 : index
      %56 = vector.load %arg16[%c0_29, %c0_30] : memref<2x32xf32, #tpu.memory_space<vmem>>, vector<1x32xf32>
      %cst_31 = arith.constant dense<0.000000e+00> : vector<32xf32>
      %57 = vector.multi_reduction <add>, %55, %cst_31 [0] : vector<32x32xf32> to vector<32xf32>
      %58 = vector.shape_cast %57 : vector<32xf32> to vector<1x32xf32>
      %59 = arith.addf %56, %58 : vector<1x32xf32>
      %c0_32 = arith.constant 0 : index
      %c0_33 = arith.constant 0 : index
      %60 = vector.load %arg16[%c0_32, %c0_33] : memref<2x32xf32, #tpu.memory_space<vmem>>, vector<1x32xf32>
      tpu.vector_store %arg16[%c0_32, %c0_33], %59 {strides = array<i32>} : memref<2x32xf32, #tpu.memory_space<vmem>>, vector<1x32xf32>,
      %c1_34 = arith.constant 1 : index
      %c0_35 = arith.constant 0 : index
      %61 = vector.load %arg16[%c1_34, %c0_35] : memref<2x32xf32, #tpu.memory_space<vmem>>, vector<1x32xf32>
      %62 = arith.mulf %55, %51 : vector<32x32xf32>
      %cst_36 = arith.constant dense<0.000000e+00> : vector<32xf32>
      %63 = vector.multi_reduction <add>, %62, %cst_36 [0] : vector<32x32xf32> to vector<32xf32>
      %64 = vector.shape_cast %63 : vector<32xf32> to vector<1x32xf32>
      %65 = arith.addf %61, %64 : vector<1x32xf32>
      %c1_37 = arith.constant 1 : index
      %c0_38 = arith.constant 0 : index
      %66 = vector.load %arg16[%c1_37, %c0_38] : memref<2x32xf32, #tpu.memory_space<vmem>>, vector<1x32xf32>
      tpu.vector_store %arg16[%c1_37, %c0_38], %65 {strides = array<i32>} : memref<2x32xf32, #tpu.memory_space<vmem>>, vector<1x32xf32>,
      %c0_39 = arith.constant 0 : index
      %c0_40 = arith.constant 0 : index
      %c0_41 = arith.constant 0 : index
      %67 = vector.load %arg10[%c0_39, %c0_40, %c0_41] : memref<1x32x32xf32, #tpu.memory_space<vmem>>, vector<1x32x32xf32>
      %68 = vector.shape_cast %67 : vector<1x32x32xf32> to vector<32x32xf32>
      %69 = vector.shape_cast %51 : vector<32x32xf32> to vector<1x32x32xf32>
      tpu.vector_store %arg10[%c0_39, %c0_40, %c0_41], %69 {strides = array<i32>} : memref<1x32x32xf32, #tpu.memory_space<vmem>>, vector<1x32x32xf32>,
      %c0_i32_42 = arith.constant 0 : i32
      %70 = vector.broadcast %c0_i32_42 : i32 to vector<32x3xi32>
      %c0_43 = arith.constant 0 : index
      %c0_44 = arith.constant 0 : index
      %c0_45 = arith.constant 0 : index
      %71 = vector.load %arg12[%c0_43, %c0_44, %c0_45] : memref<1x32x3xi32, #tpu.memory_space<vmem>>, vector<1x32x3xi32>
      %72 = vector.shape_cast %71 : vector<1x32x3xi32> to vector<32x3xi32>
      %73 = vector.shape_cast %70 : vector<32x3xi32> to vector<1x32x3xi32>
      tpu.vector_store %arg12[%c0_43, %c0_44, %c0_45], %73 {strides = array<i32>} : memref<1x32x3xi32, #tpu.memory_space<vmem>>, vector<1x32x3xi32>,
    } else {
    }
    %c1_i32 = arith.constant 1 : i32
    %24 = arith.cmpi eq, %arg1, %c1_i32 : i32
    %25 = arith.extui %24 : i1 to i32
    %c0_i32_9 = arith.constant 0 : i32
    %26 = arith.cmpi ne, %25, %c0_i32_9 : i32
    scf.if %26 {
      %27 = arith.index_cast %1 : i32 to index
      %c0 = arith.constant 0 : index
      %28 = vector.load %arg15[%27, %c0] : memref<32x32xf32, #tpu.memory_space<vmem>>, vector<32x32xf32>
      %c0_10 = arith.constant 0 : index
      %c0_11 = arith.constant 0 : index
      %29 = vector.load %arg16[%c0_10, %c0_11] : memref<2x32xf32, #tpu.memory_space<vmem>>, vector<1x32xf32>
      %cst = arith.constant 3.125000e-02 : f32
      %30 = vector.broadcast %cst : f32 to vector<1x32xf32>
      %31 = arith.mulf %29, %30 : vector<1x32xf32>
      %c1 = arith.constant 1 : index
      %c0_12 = arith.constant 0 : index
      %32 = vector.load %arg16[%c1, %c0_12] : memref<2x32xf32, #tpu.memory_space<vmem>>, vector<1x32xf32>
      %cst_13 = arith.constant 3.125000e-02 : f32
      %33 = vector.broadcast %cst_13 : f32 to vector<1x32xf32>
      %34 = arith.mulf %32, %33 : vector<1x32xf32>
      %35 = arith.mulf %31, %31 : vector<1x32xf32>
      %36 = arith.subf %34, %35 : vector<1x32xf32>
      %37 = vector.broadcast %31 : vector<1x32xf32> to vector<32x32xf32>
      %38 = arith.subf %28, %37 : vector<32x32xf32>
      %cst_14 = arith.constant 9.99999974E-6 : f32
      %39 = vector.broadcast %cst_14 : f32 to vector<1x32xf32>
      %40 = arith.addf %36, %39 : vector<1x32xf32>
      %41 = math.rsqrt %40 : vector<1x32xf32>
      %42 = vector.broadcast %41 : vector<1x32xf32> to vector<32x32xf32>
      %43 = arith.mulf %38, %42 : vector<32x32xf32>
      %c0_15 = arith.constant 0 : index
      %c2 = arith.constant 2 : index
      %c0_16 = arith.constant 0 : index
      %44 = vector.load %arg8[%c0_15, %c2, %c0_16] : memref<1x4x32xf32, #tpu.memory_space<vmem>>, vector<1x1x32xf32>
      %45 = vector.shape_cast %44 : vector<1x1x32xf32> to vector<1x32xf32>
      %46 = vector.broadcast %45 : vector<1x32xf32> to vector<32x32xf32>
      %47 = arith.mulf %43, %46 : vector<32x32xf32>
      %c0_17 = arith.constant 0 : index
      %c3 = arith.constant 3 : index
      %c0_18 = arith.constant 0 : index
      %48 = vector.load %arg8[%c0_17, %c3, %c0_18] : memref<1x4x32xf32, #tpu.memory_space<vmem>>, vector<1x1x32xf32>
      %49 = vector.shape_cast %48 : vector<1x1x32xf32> to vector<1x32xf32>
      %50 = vector.broadcast %49 : vector<1x32xf32> to vector<32x32xf32>
      %51 = arith.addf %47, %50 : vector<32x32xf32>
      %c0_19 = arith.constant 0 : index
      %c0_20 = arith.constant 0 : index
      %c0_21 = arith.constant 0 : index
      %52 = vector.load %arg10[%c0_19, %c0_20, %c0_21] : memref<1x32x32xf32, #tpu.memory_space<vmem>>, vector<1x32x32xf32>
      %53 = vector.shape_cast %52 : vector<1x32x32xf32> to vector<32x32xf32>
      %54 = vector.shape_cast %51 : vector<32x32xf32> to vector<1x32x32xf32>
      tpu.vector_store %arg10[%c0_19, %c0_20, %c0_21], %54 {strides = array<i32>} : memref<1x32x32xf32, #tpu.memory_space<vmem>>, vector<1x32x32xf32>,
      %55 = arith.truncf %51 : vector<32x32xf32> to vector<32x32xbf16>
      %56 = arith.index_cast %1 : i32 to index
      %c0_22 = arith.constant 0 : index
      %57 = vector.load %arg14[%56, %c0_22] : memref<32x32xbf16, #tpu.memory_space<vmem>>, vector<32x32xbf16>
      tpu.vector_store %arg14[%56, %c0_22], %55 {strides = array<i32>} : memref<32x32xbf16, #tpu.memory_space<vmem>>, vector<32x32xbf16>,
      %c0_23 = arith.constant 0 : index
      %c0_24 = arith.constant 0 : index
      %c0_25 = arith.constant 0 : index
      %58 = vector.load %arg11[%c0_23, %c0_24, %c0_25] : memref<1x4x32xf32, #tpu.memory_space<vmem>>, vector<1x4x32xf32>
      %59 = vector.shape_cast %58 : vector<1x4x32xf32> to vector<4x32xf32>
      %c0_26 = arith.constant 0 : index
      %c0_27 = arith.constant 0 : index
      %60 = vector.load %arg5[%c0_26, %c0_27] : memref<4x32xbf16, #tpu.memory_space<vmem>>, vector<4x32xbf16>
      %61 = arith.truncf %51 : vector<32x32xf32> to vector<32x32xbf16>
      %cst_28 = arith.constant dense<0.000000e+00> : vector<4x32xf32>
      %62 = tpu.matmul %60, %61, %cst_28 {dimension_numbers = #tpu.dot_dimension_numbers<[1], [0], [0], [1], [0, 0, 1, 1], [], []>} : vector<4x32xbf16>, vector<32x32xbf16>, vector<4x32xf32> -> vector<4x32xf32>
      %63 = arith.addf %59, %62 : vector<4x32xf32>
      %c0_29 = arith.constant 0 : index
      %c0_30 = arith.constant 0 : index
      %c0_31 = arith.constant 0 : index
      %64 = vector.load %arg11[%c0_29, %c0_30, %c0_31] : memref<1x4x32xf32, #tpu.memory_space<vmem>>, vector<1x4x32xf32>
      %65 = vector.shape_cast %64 : vector<1x4x32xf32> to vector<4x32xf32>
      %66 = vector.shape_cast %63 : vector<4x32xf32> to vector<1x4x32xf32>
      tpu.vector_store %arg11[%c0_29, %c0_30, %c0_31], %66 {strides = array<i32>} : memref<1x4x32xf32, #tpu.memory_space<vmem>>, vector<1x4x32xf32>,
      %67 = tpu.iota {dimensions = array<i32: 1>} : vector<1x128xi32>
      %c16_i32 = arith.constant 16 : i32
      %68 = vector.broadcast %c16_i32 : i32 to vector<1x128xi32>
      %69 = arith.cmpi slt, %67, %68 : vector<1x128xi32>
      %70 = arith.mulf %51, %51 : vector<32x32xf32>
      %cst_32 = arith.constant dense<0.000000e+00> : vector<32xf32>
      %71 = vector.multi_reduction <add>, %70, %cst_32 [1] : vector<32x32xf32> to vector<32xf32>
      %72 = vector.shape_cast %71 : vector<32xf32> to vector<32x1xf32>
      %cst_33 = arith.constant 9.99999996E-13 : f32
      %73 = vector.broadcast %cst_33 : f32 to vector<32x1xf32>
      %74 = arith.addf %72, %73 : vector<32x1xf32>
      %75 = math.rsqrt %74 : vector<32x1xf32>
      %76 = vector.broadcast %75 : vector<32x1xf32> to vector<32x32xf32>
      %77 = arith.mulf %51, %76 : vector<32x32xf32>
      %c0_34 = arith.constant 0 : index
      %c0_35 = arith.constant 0 : index
      %c0_36 = arith.constant 0 : index
      %c0_37 = arith.constant 0 : index
      %78 = vector.load %arg9[%c0_34, %c0_35, %c0_36, %c0_37] : memref<1x3x128x32xbf16, #tpu.memory_space<vmem>>, vector<1x1x128x32xbf16>
      %79 = vector.shape_cast %78 : vector<1x1x128x32xbf16> to vector<128x32xbf16>
      %80 = arith.truncf %77 : vector<32x32xf32> to vector<32x32xbf16>
      %cst_38 = arith.constant dense<0.000000e+00> : vector<32x128xf32>
      %81 = tpu.matmul %80, %79, %cst_38 {dimension_numbers = #tpu.dot_dimension_numbers<[1], [1], [0], [0], [0, 0, 1, 0], [], []>} : vector<32x32xbf16>, vector<128x32xbf16>, vector<32x128xf32> -> vector<32x128xf32>
      %cst_39 = arith.constant -1.000000e+30 : f32
      %82 = vector.shape_cast %69 : vector<1x128xi1> to vector<1x128xi1>
      %83 = vector.broadcast %82 : vector<1x128xi1> to vector<32x128xi1>
      %84 = vector.broadcast %cst_39 : f32 to vector<32x128xf32>
      %85 = arith.select %83, %81, %84 : vector<32x128xi1>, vector<32x128xf32>
      %cst_40 = arith.constant dense<0xFF800000> : vector<32xf32>
      %86 = vector.multi_reduction <maximumf>, %85, %cst_40 [1] : vector<32x128xf32> to vector<32xf32>
      %87 = vector.shape_cast %86 : vector<32xf32> to vector<32x1xf32>
      %88 = vector.broadcast %87 : vector<32x1xf32> to vector<32x128xf32>
      %89 = arith.cmpf oge, %85, %88 : vector<32x128xf32>
      %c128_i32 = arith.constant 128 : i32
      %90 = vector.shape_cast %67 : vector<1x128xi32> to vector<1x128xi32>
      %91 = vector.broadcast %90 : vector<1x128xi32> to vector<32x128xi32>
      %92 = vector.broadcast %c128_i32 : i32 to vector<32x128xi32>
      %93 = arith.select %89, %91, %92 : vector<32x128xi1>, vector<32x128xi32>
      %cst_41 = arith.constant dense<2147483647> : vector<32xi32>
      %94 = vector.multi_reduction <minsi>, %93, %cst_41 [1] : vector<32x128xi32> to vector<32xi32>
      %95 = vector.shape_cast %94 : vector<32xi32> to vector<32x1xi32>
      %96 = vector.broadcast %67 : vector<1x128xi32> to vector<32x128xi32>
      %97 = vector.broadcast %95 : vector<32x1xi32> to vector<32x128xi32>
      %98 = arith.cmpi eq, %96, %97 : vector<32x128xi32>
      %99 = arith.extui %98 : vector<32x128xi1> to vector<32x128xi32>
      %100 = arith.sitofp %99 : vector<32x128xi32> to vector<32x128xf32>
      %101 = arith.truncf %100 : vector<32x128xf32> to vector<32x128xbf16>
      %cst_42 = arith.constant dense<0.000000e+00> : vector<32x32xf32>
      %102 = tpu.matmul %101, %79, %cst_42 {dimension_numbers = #tpu.dot_dimension_numbers<[1], [0], [0], [1], [0, 0, 1, 1], [], []>} : vector<32x128xbf16>, vector<128x32xbf16>, vector<32x32xf32> -> vector<32x32xf32>
      %103 = arith.subf %102, %51 : vector<32x32xf32>
      %104 = vector.broadcast %8 : vector<32x1xf32> to vector<32x32xf32>
      %105 = arith.mulf %103, %104 : vector<32x32xf32>
      %106 = arith.mulf %105, %105 : vector<32x32xf32>
      %107 = vector.shape_cast %106 : vector<32x32xf32> to vector<1x32x32xf32>
      %cst_43 = arith.constant dense<0.000000e+00> : vector<1xf32>
      %108 = vector.multi_reduction <add>, %107, %cst_43 [1, 2] : vector<1x32x32xf32> to vector<1xf32>
      %109 = vector.shape_cast %108 : vector<1xf32> to vector<1x1x1xf32>
      %110 = vector.extract %109[0, 0, 0] : f32 from vector<1x1x1xf32>
      %cst_44 = arith.constant 0.000000e+00 : f32
      %111 = arith.addf %cst_44, %110 : f32
      %112 = arith.subf %51, %102 : vector<32x32xf32>
      %113 = arith.mulf %112, %112 : vector<32x32xf32>
      %cst_45 = arith.constant dense<0.000000e+00> : vector<32xf32>
      %114 = vector.multi_reduction <add>, %113, %cst_45 [1] : vector<32x32xf32> to vector<32xf32>
      %115 = vector.shape_cast %114 : vector<32xf32> to vector<32x1xf32>
      %cst_46 = arith.constant 9.99999996E-13 : f32
      %116 = vector.broadcast %cst_46 : f32 to vector<32x1xf32>
      %117 = arith.addf %115, %116 : vector<32x1xf32>
      %118 = math.rsqrt %117 : vector<32x1xf32>
      %119 = vector.broadcast %118 : vector<32x1xf32> to vector<32x32xf32>
      %120 = arith.mulf %112, %119 : vector<32x32xf32>
      %c0_47 = arith.constant 0 : index
      %c1_48 = arith.constant 1 : index
      %c0_49 = arith.constant 0 : index
      %c0_50 = arith.constant 0 : index
      %121 = vector.load %arg9[%c0_47, %c1_48, %c0_49, %c0_50] : memref<1x3x128x32xbf16, #tpu.memory_space<vmem>>, vector<1x1x128x32xbf16>
      %122 = vector.shape_cast %121 : vector<1x1x128x32xbf16> to vector<128x32xbf16>
      %123 = arith.truncf %120 : vector<32x32xf32> to vector<32x32xbf16>
      %cst_51 = arith.constant dense<0.000000e+00> : vector<32x128xf32>
      %124 = tpu.matmul %123, %122, %cst_51 {dimension_numbers = #tpu.dot_dimension_numbers<[1], [1], [0], [0], [0, 0, 1, 0], [], []>} : vector<32x32xbf16>, vector<128x32xbf16>, vector<32x128xf32> -> vector<32x128xf32>
      %cst_52 = arith.constant -1.000000e+30 : f32
      %125 = vector.shape_cast %69 : vector<1x128xi1> to vector<1x128xi1>
      %126 = vector.broadcast %125 : vector<1x128xi1> to vector<32x128xi1>
      %127 = vector.broadcast %cst_52 : f32 to vector<32x128xf32>
      %128 = arith.select %126, %124, %127 : vector<32x128xi1>, vector<32x128xf32>
      %cst_53 = arith.constant dense<0xFF800000> : vector<32xf32>
      %129 = vector.multi_reduction <maximumf>, %128, %cst_53 [1] : vector<32x128xf32> to vector<32xf32>
      %130 = vector.shape_cast %129 : vector<32xf32> to vector<32x1xf32>
      %131 = vector.broadcast %130 : vector<32x1xf32> to vector<32x128xf32>
      %132 = arith.cmpf oge, %128, %131 : vector<32x128xf32>
      %c128_i32_54 = arith.constant 128 : i32
      %133 = vector.shape_cast %67 : vector<1x128xi32> to vector<1x128xi32>
      %134 = vector.broadcast %133 : vector<1x128xi32> to vector<32x128xi32>
      %135 = vector.broadcast %c128_i32_54 : i32 to vector<32x128xi32>
      %136 = arith.select %132, %134, %135 : vector<32x128xi1>, vector<32x128xi32>
      %cst_55 = arith.constant dense<2147483647> : vector<32xi32>
      %137 = vector.multi_reduction <minsi>, %136, %cst_55 [1] : vector<32x128xi32> to vector<32xi32>
      %138 = vector.shape_cast %137 : vector<32xi32> to vector<32x1xi32>
      %139 = vector.broadcast %67 : vector<1x128xi32> to vector<32x128xi32>
      %140 = vector.broadcast %138 : vector<32x1xi32> to vector<32x128xi32>
      %141 = arith.cmpi eq, %139, %140 : vector<32x128xi32>
      %142 = arith.extui %141 : vector<32x128xi1> to vector<32x128xi32>
      %143 = arith.sitofp %142 : vector<32x128xi32> to vector<32x128xf32>
      %144 = arith.truncf %143 : vector<32x128xf32> to vector<32x128xbf16>
      %cst_56 = arith.constant dense<0.000000e+00> : vector<32x32xf32>
      %145 = tpu.matmul %144, %122, %cst_56 {dimension_numbers = #tpu.dot_dimension_numbers<[1], [0], [0], [1], [0, 0, 1, 1], [], []>} : vector<32x128xbf16>, vector<128x32xbf16>, vector<32x32xf32> -> vector<32x32xf32>
      %146 = arith.subf %145, %112 : vector<32x32xf32>
      %147 = vector.broadcast %8 : vector<32x1xf32> to vector<32x32xf32>
      %148 = arith.mulf %146, %147 : vector<32x32xf32>
      %149 = arith.mulf %148, %148 : vector<32x32xf32>
      %150 = vector.shape_cast %149 : vector<32x32xf32> to vector<1x32x32xf32>
      %cst_57 = arith.constant dense<0.000000e+00> : vector<1xf32>
      %151 = vector.multi_reduction <add>, %150, %cst_57 [1, 2] : vector<1x32x32xf32> to vector<1xf32>
      %152 = vector.shape_cast %151 : vector<1xf32> to vector<1x1x1xf32>
      %153 = vector.extract %152[0, 0, 0] : f32 from vector<1x1x1xf32>
      %154 = arith.addf %111, %153 : f32
      %155 = arith.subf %112, %145 : vector<32x32xf32>
      %156 = arith.mulf %155, %155 : vector<32x32xf32>
      %cst_58 = arith.constant dense<0.000000e+00> : vector<32xf32>
      %157 = vector.multi_reduction <add>, %156, %cst_58 [1] : vector<32x32xf32> to vector<32xf32>
      %158 = vector.shape_cast %157 : vector<32xf32> to vector<32x1xf32>
      %cst_59 = arith.constant 9.99999996E-13 : f32
      %159 = vector.broadcast %cst_59 : f32 to vector<32x1xf32>
      %160 = arith.addf %158, %159 : vector<32x1xf32>
      %161 = math.rsqrt %160 : vector<32x1xf32>
      %162 = vector.broadcast %161 : vector<32x1xf32> to vector<32x32xf32>
      %163 = arith.mulf %155, %162 : vector<32x32xf32>
      %c0_60 = arith.constant 0 : index
      %c2_61 = arith.constant 2 : index
      %c0_62 = arith.constant 0 : index
      %c0_63 = arith.constant 0 : index
      %164 = vector.load %arg9[%c0_60, %c2_61, %c0_62, %c0_63] : memref<1x3x128x32xbf16, #tpu.memory_space<vmem>>, vector<1x1x128x32xbf16>
      %165 = vector.shape_cast %164 : vector<1x1x128x32xbf16> to vector<128x32xbf16>
      %166 = arith.truncf %163 : vector<32x32xf32> to vector<32x32xbf16>
      %cst_64 = arith.constant dense<0.000000e+00> : vector<32x128xf32>
      %167 = tpu.matmul %166, %165, %cst_64 {dimension_numbers = #tpu.dot_dimension_numbers<[1], [1], [0], [0], [0, 0, 1, 0], [], []>} : vector<32x32xbf16>, vector<128x32xbf16>, vector<32x128xf32> -> vector<32x128xf32>
      %cst_65 = arith.constant -1.000000e+30 : f32
      %168 = vector.shape_cast %69 : vector<1x128xi1> to vector<1x128xi1>
      %169 = vector.broadcast %168 : vector<1x128xi1> to vector<32x128xi1>
      %170 = vector.broadcast %cst_65 : f32 to vector<32x128xf32>
      %171 = arith.select %169, %167, %170 : vector<32x128xi1>, vector<32x128xf32>
      %cst_66 = arith.constant dense<0xFF800000> : vector<32xf32>
      %172 = vector.multi_reduction <maximumf>, %171, %cst_66 [1] : vector<32x128xf32> to vector<32xf32>
      %173 = vector.shape_cast %172 : vector<32xf32> to vector<32x1xf32>
      %174 = vector.broadcast %173 : vector<32x1xf32> to vector<32x128xf32>
      %175 = arith.cmpf oge, %171, %174 : vector<32x128xf32>
      %c128_i32_67 = arith.constant 128 : i32
      %176 = vector.shape_cast %67 : vector<1x128xi32> to vector<1x128xi32>
      %177 = vector.broadcast %176 : vector<1x128xi32> to vector<32x128xi32>
      %178 = vector.broadcast %c128_i32_67 : i32 to vector<32x128xi32>
      %179 = arith.select %175, %177, %178 : vector<32x128xi1>, vector<32x128xi32>
      %cst_68 = arith.constant dense<2147483647> : vector<32xi32>
      %180 = vector.multi_reduction <minsi>, %179, %cst_68 [1] : vector<32x128xi32> to vector<32xi32>
      %181 = vector.shape_cast %180 : vector<32xi32> to vector<32x1xi32>
      %182 = vector.broadcast %67 : vector<1x128xi32> to vector<32x128xi32>
      %183 = vector.broadcast %181 : vector<32x1xi32> to vector<32x128xi32>
      %184 = arith.cmpi eq, %182, %183 : vector<32x128xi32>
      %185 = arith.extui %184 : vector<32x128xi1> to vector<32x128xi32>
      %186 = arith.sitofp %185 : vector<32x128xi32> to vector<32x128xf32>
      %187 = arith.truncf %186 : vector<32x128xf32> to vector<32x128xbf16>
      %cst_69 = arith.constant dense<0.000000e+00> : vector<32x32xf32>
      %188 = tpu.matmul %187, %165, %cst_69 {dimension_numbers = #tpu.dot_dimension_numbers<[1], [0], [0], [1], [0, 0, 1, 1], [], []>} : vector<32x128xbf16>, vector<128x32xbf16>, vector<32x32xf32> -> vector<32x32xf32>
      %189 = arith.subf %188, %155 : vector<32x32xf32>
      %190 = vector.broadcast %8 : vector<32x1xf32> to vector<32x32xf32>
      %191 = arith.mulf %189, %190 : vector<32x32xf32>
      %192 = arith.mulf %191, %191 : vector<32x32xf32>
      %193 = vector.shape_cast %192 : vector<32x32xf32> to vector<1x32x32xf32>
      %cst_70 = arith.constant dense<0.000000e+00> : vector<1xf32>
      %194 = vector.multi_reduction <add>, %193, %cst_70 [1, 2] : vector<1x32x32xf32> to vector<1xf32>
      %195 = vector.shape_cast %194 : vector<1xf32> to vector<1x1x1xf32>
      %196 = vector.extract %195[0, 0, 0] : f32 from vector<1x1x1xf32>
      %197 = arith.addf %154, %196 : f32
      %198 = tpu.concatenate %95, %138, %181 in 1 : vector<32x1xi32>, vector<32x1xi32>, vector<32x1xi32> -> vector<32x3xi32>
      %c0_71 = arith.constant 0 : index
      %c0_72 = arith.constant 0 : index
      %c0_73 = arith.constant 0 : index
      %199 = vector.load %arg12[%c0_71, %c0_72, %c0_73] : memref<1x32x3xi32, #tpu.memory_space<vmem>>, vector<1x32x3xi32>
      %200 = vector.shape_cast %199 : vector<1x32x3xi32> to vector<32x3xi32>
      %201 = vector.shape_cast %198 : vector<32x3xi32> to vector<1x32x3xi32>
      tpu.vector_store %arg12[%c0_71, %c0_72, %c0_73], %201 {strides = array<i32>} : memref<1x32x3xi32, #tpu.memory_space<vmem>>, vector<1x32x3xi32>,
      %c0_74 = arith.constant 0 : index
      %202 = memref.load %arg13[%c0_74] : memref<1xf32, #tpu.memory_space<smem>>
      %cst_75 = arith.constant 2.500000e-01 : f32
      %203 = arith.mulf %cst_75, %197 : f32
      %cst_76 = arith.constant 9.765625E-4 : f32
      %204 = arith.mulf %203, %cst_76 : f32
      %205 = arith.addf %202, %204 : f32
      %c0_77 = arith.constant 0 : index
      %206 = memref.load %arg13[%c0_77] : memref<1xf32, #tpu.memory_space<smem>>
      memref.store %205, %arg13[%c0_77] : memref<1xf32, #tpu.memory_space<smem>>
    } else {
    }
    return
  }
  func.func @transform_0(%arg0: i32, %arg1: i32, %arg2: i32) -> (i32, i32) {
    %c1_i32 = arith.constant 1 : i32
    %0 = arith.subi %c1_i32, %arg1 : i32
    %1 = arith.muli %arg2, %0 : i32
    %c0_i32 = arith.constant 0 : i32
    %c0_i32_0 = arith.constant 0 : i32
    return %1, %c0_i32 : i32, i32
  }
  func.func @transform_1(%arg0: i32, %arg1: i32, %arg2: i32) -> (i32, i32) {
    %c0_i32 = arith.constant 0 : i32
    %c0_i32_0 = arith.constant 0 : i32
    %c0_i32_1 = arith.constant 0 : i32
    return %c0_i32, %c0_i32_0 : i32, i32
  }
  func.func @transform_2(%arg0: i32, %arg1: i32, %arg2: i32) -> (i32, i32) {
    %0 = arith.muli %arg2, %arg1 : i32
    %c0_i32 = arith.constant 0 : i32
    %c0_i32_0 = arith.constant 0 : i32
    return %c0_i32, %0 : i32, i32
  }
  func.func @transform_3(%arg0: i32, %arg1: i32, %arg2: i32) -> (i32, i32, i32) {
    %c0_i32 = arith.constant 0 : i32
    %c0_i32_0 = arith.constant 0 : i32
    %c0_i32_1 = arith.constant 0 : i32
    return %arg0, %c0_i32, %c0_i32_0 : i32, i32, i32
  }
  func.func @transform_4(%arg0: i32, %arg1: i32, %arg2: i32) -> (i32, i32, i32) {
    %c0_i32 = arith.constant 0 : i32
    %c0_i32_0 = arith.constant 0 : i32
    %c0_i32_1 = arith.constant 0 : i32
    return %arg0, %c0_i32, %c0_i32_0 : i32, i32, i32
  }
  func.func @transform_5(%arg0: i32, %arg1: i32, %arg2: i32) -> (i32, i32, i32) {
    %c0_i32 = arith.constant 0 : i32
    %c0_i32_0 = arith.constant 0 : i32
    %c0_i32_1 = arith.constant 0 : i32
    return %arg0, %c0_i32, %c0_i32_0 : i32, i32, i32
  }
  func.func @transform_6(%arg0: i32, %arg1: i32, %arg2: i32) -> (i32, i32, i32, i32) {
    %c0_i32 = arith.constant 0 : i32
    %c0_i32_0 = arith.constant 0 : i32
    %c0_i32_1 = arith.constant 0 : i32
    %c0_i32_2 = arith.constant 0 : i32
    return %arg0, %c0_i32, %c0_i32_0, %c0_i32_1 : i32, i32, i32, i32
  }
  func.func @transform_7(%arg0: i32, %arg1: i32, %arg2: i32) -> (i32, i32, i32) {
    %c0_i32 = arith.constant 0 : i32
    %c0_i32_0 = arith.constant 0 : i32
    return %arg0, %arg2, %c0_i32 : i32, i32, i32
  }
  func.func @transform_8(%arg0: i32, %arg1: i32, %arg2: i32) -> (i32, i32, i32) {
    %c0_i32 = arith.constant 0 : i32
    %c0_i32_0 = arith.constant 0 : i32
    %c0_i32_1 = arith.constant 0 : i32
    return %arg0, %c0_i32, %c0_i32_0 : i32, i32, i32
  }
  func.func @transform_9(%arg0: i32, %arg1: i32, %arg2: i32) -> (i32, i32, i32) {
    %c0_i32 = arith.constant 0 : i32
    %c0_i32_0 = arith.constant 0 : i32
    return %arg0, %arg2, %c0_i32 : i32, i32, i32
  }
  func.func @transform_10(%arg0: i32, %arg1: i32, %arg2: i32) -> i32 {
    %c0_i32 = arith.constant 0 : i32
    %c0_i32_0 = arith.constant 0 : i32
    return %c0_i32 : i32
  }
}

</mosaic_0001>

<llo_original>
// kernel: tpu_custom_call.1
$region0: #{tpu_custom_call.1}
  #allocation0 [shape = 'u32[]', space=smem, size = 0x4, offset = 0x4, fixed_abs, tag = 'smem constant byte address 0x4 - core index']
  #allocation1 [shape = 'u32[144,128]{1,0:T(1,128)}', space=vmem, size = 0x12000, scoped, tag = 'internal scratch']
  #allocation2 [shape = 'bf16[32,32]{1,0:T(8,128)(2,1)}', space=vmem, size = 0x2000, scoped, tag = 'scratch operand']
  #allocation3 [shape = 'f32[32,32]{1,0:T(8,128)}', space=vmem, size = 0x4000, scoped, tag = 'scratch operand']
  #allocation4 [shape = 'f32[2,32]{1,0:T(2,128)}', space=vmem, size = 0x400, scoped, tag = 'scratch operand']
  %s0 = inlined_call_operand.vmem [shape: s8[32,32], index: 0, kind: input, shape index: {}]
  %s1 = inlined_call_operand.vmem [shape: bf16[32,32], index: 1, kind: input, shape index: {}]
  %s2 = inlined_call_operand.vmem [shape: bf16[4,32], index: 2, kind: input, shape index: {}]
  %s3 = inlined_call_operand.vmem [shape: bf16[3,32,32], index: 3, kind: input, shape index: {}]
  %s4 = inlined_call_operand.vmem [shape: bf16[3,32,32], index: 4, kind: input, shape index: {}]
  %s5 = inlined_call_operand.vmem [shape: f32[3,4,32], index: 5, kind: input, shape index: {}]
  %s6 = inlined_call_operand.vmem [shape: bf16[3,3,128,32], index: 6, kind: input, shape index: {}]
  %s7 = inlined_call_operand.hbm [shape: f32[3,32,32], index: 7, kind: output, shape index: {0}]
  %s8 = inlined_call_operand.hbm [shape: f32[3,4,32], index: 8, kind: output, shape index: {1}]
  %s9 = inlined_call_operand.vmem [shape: s32[3,32,3], index: 9, kind: output, shape index: {2}]
  %s10 = inlined_call_operand.hbm [shape: f32[1], index: 10, kind: output, shape index: {3}]
  %11 = xla_tuple %s7, %s8, %s9, %s10
  %s12 = sld [smem:[#allocation0]]
  $region101: #{tpu_custom_call.1} parent=0
    _
  %s14 = ssub.s32 1, %s12
  %s15 = scalar_select 0, %s14, %s12
  $region1: #{tpu_custom_call.1} parent=0
    #allocation5 [shape = 'u8[32768]{0}', space=vmem, size = 0x8000, scoped, tag = 'output window, operand 0']
    #allocation6 [shape = 's32[2]{0}', space=sflag, size = 0x8, scoped, tag = 'scoped memory for tpu_custom_call.1']
    #allocation7 [shape = 's32[2]{0}', space=sflag, size = 0x8, scoped, tag = 'scoped memory for tpu_custom_call.1']
    #allocation8 [shape = 'u8[4096]{0}', space=vmem, size = 0x1000, scoped, tag = 'output window, operand 1']
    #allocation9 [shape = 's32[2]{0}', space=sflag, size = 0x8, scoped, tag = 'scoped memory for tpu_custom_call.1']
    #allocation10 [shape = 'u8[512]{0}', space=smem, size = 0x200, scoped, tag = 'output window, operand 3, single buffered']
    %16 = vsyncpa [#allocation6], 0
    %s17 = scalar_lea.sflag [#allocation6], 1
    %18 = vsyncpa %s17, 0
    %19 = vsyncpa [#allocation9], 0
    %s20 = scalar_lea.sflag [#allocation9], 1
    %21 = vsyncpa %s20, 0
    %22 = vsyncpa [#allocation7], 0
    loop: start=0, step=1, limit=8
    $region2: #{tpu_custom_call.1} parent=1 // loop_pre_header
      _
    $region3: #{tpu_custom_call.1} parent=1 // loop_header
      %s24 = sphi 0, %s28
      %p25 = scmp.ge.s32.totalorder %s24, 8
      %s31 = sphi 0, %s50
      %s32 = sphi 0, %s46
      %s33 = sphi 0, %s42
      %s34 = sphi 0, %s31
      %s35 = sphi 0, %s32
      %s36 = sphi 0, %s33
      %s37 = sphi 0, %s34
      %s38 = sphi 0, %s35
      %s39 = sphi 0, %s36
      %s57 = sphi 0, %s59
      %s60 = sphi 0, %s57
      %s61 = sphi 0, %s60
      %s77 = sphi 0, %s61
      %s81 = sphi 0, %s81
      %s83 = sphi 0, %s81
      %s84 = sphi 0, %s83
      %s98 = sphi 0, %s84
      %s106 = sphi 0, %s108
      %s109 = sphi 0, %s106
      %s110 = sphi 0, %s109
      %s126 = sphi 0, %s110
      %s132 = sphi 0, %s134
      %s135 = sphi 0, %s132
      %s136 = sphi 0, %s135
      %s152 = sphi 0, %s136
      %s158 = sphi 0, %s160
      %s161 = sphi 0, %s158
      %s162 = sphi 0, %s161
      %s178 = sphi 0, %s162
      %s184 = sphi 0, %s186
      %s187 = sphi 0, %s184
      %s188 = sphi 0, %s187
      %s204 = sphi 0, %s188
      %s210 = sphi 0, %s212
      %s213 = sphi 0, %s210
      %s214 = sphi 0, %s213
      %s230 = sphi 0, %s214
      %s238 = sphi 0, %s240
      %s241 = sphi 0, %s238
      %s242 = sphi 0, %s241
      %s258 = sphi 0, %s242
      %s264 = sphi 0, %s266
      %s267 = sphi 0, %s264
      %s268 = sphi 0, %s267
      %s284 = sphi 0, %s268
      %s292 = sphi 0, %s294
      %s295 = sphi 0, %s292
      %s296 = sphi 0, %s295
      %s312 = sphi 0, %s296
      %s316 = sphi 0, %s316
      %s318 = sphi 0, %s316
      %s319 = sphi 0, %s318
      %s333 = sphi 0, %s319
    $region4: #{tpu_custom_call.1} parent=1 // loop_header_branch
      %27 = sbr.rel (%p25) target = $region8
    $region5: #{tpu_custom_call.1} parent=1 // loop_body
      %s29 = ssub.s32 %s24, 1
      %s30 = ssub.s32 %s24, 2
      %s40 = sadd.s32 1, %s33
      %p41 = scmp.ge.s32.totalorder %s40, 1
      %s42 = scalar_select %p41, 0, %s40
      %s43 = sadd.s32 1, %s32
      %s44 = scalar_select %p41, %s43, %s32
      %p45 = scmp.ge.s32.totalorder %s44, 2
      %s46 = scalar_select %p45, 0, %s44
      %s47 = sadd.s32 1, %s31
      %s48 = scalar_select %p45, %s47, %s31
      %p49 = scmp.ge.s32.totalorder %s48, 3
      %s50 = scalar_select %p49, 0, %s48
      %s51 = ssub.s32 1, %s32
      %s52 = smul.u32 %s33, %s51
      %s53 = ssub.s32 1, %s46
      %s54 = smul.u32 %s42, %s53
      %s55 = ssub.s32 %s52, %s54
      %p56 = scmp.eq.s32.totalorder %s55, 0
      %s58 = sadd.s32 %s57, 1
      %s59 = scalar_select %p56, %s57, %s58
      %p62 = pneg %p56
      %p63 = scmp.eq.s32.totalorder %s24, 5
      %p64 = por %p62, %p63
      %p65 = scmp.ne.s32.totalorder %s57, %s60
      %p66 = scmp.eq.s32.totalorder %s24, 0
      %p67 = por %p65, %p66
      %p68 = scmp.ne.s32.totalorder %s57, %s60
      %p69 = scmp.eq.s32.totalorder %s29, 5
      %p70 = por %p68, %p69
      %p71 = scmp.ne.s32.totalorder %s60, %s61
      %p72 = scmp.eq.s32.totalorder %s29, 0
      %p73 = por %p71, %p72
      %p74 = scmp.ne.s32.totalorder %s60, %s61
      %p75 = scmp.eq.s32.totalorder %s30, 5
      %p76 = por %p74, %p75
      %p78 = scmp.ne.s32.totalorder %s61, %s77
      %p79 = scmp.eq.s32.totalorder %s30, 0
      %p80 = por %p78, %p79
      %s82 = sadd.s32 %s81, 1
      %p85 = scmp.eq.s32.totalorder %s24, 5
      %p86 = scmp.ne.s32.totalorder %s81, %s83
      %p87 = scmp.eq.s32.totalorder %s24, 0
      %p88 = por %p86, %p87
      %p89 = scmp.ne.s32.totalorder %s81, %s83
      %p90 = scmp.eq.s32.totalorder %s29, 5
      %p91 = por %p89, %p90
      %p92 = scmp.ne.s32.totalorder %s83, %s84
      %p93 = scmp.eq.s32.totalorder %s29, 0
      %p94 = por %p92, %p93
      %p95 = scmp.ne.s32.totalorder %s83, %s84
      %p96 = scmp.eq.s32.totalorder %s30, 5
      %p97 = por %p95, %p96
      %p99 = scmp.ne.s32.totalorder %s84, %s98
      %p100 = scmp.eq.s32.totalorder %s30, 0
      %p101 = por %p99, %p100
      %s102 = smul.u32 %s33, %s32
      %s103 = smul.u32 %s42, %s46
      %s104 = ssub.s32 %s102, %s103
      %p105 = scmp.eq.s32.totalorder %s104, 0
      %s107 = sadd.s32 %s106, 1
      %s108 = scalar_select %p105, %s106, %s107
      %p111 = pneg %p105
      %p112 = scmp.eq.s32.totalorder %s24, 5
      %p113 = por %p111, %p112
      %p114 = scmp.ne.s32.totalorder %s106, %s109
      %p115 = scmp.eq.s32.totalorder %s24, 0
      %p116 = por %p114, %p115
      %p117 = scmp.ne.s32.totalorder %s106, %s109
      %p118 = scmp.eq.s32.totalorder %s29, 5
      %p119 = por %p117, %p118
      %p120 = scmp.ne.s32.totalorder %s109, %s110
      %p121 = scmp.eq.s32.totalorder %s29, 0
      %p122 = por %p120, %p121
      %p123 = scmp.ne.s32.totalorder %s109, %s110
      %p124 = scmp.eq.s32.totalorder %s30, 5
      %p125 = por %p123, %p124
      %p127 = scmp.ne.s32.totalorder %s110, %s126
      %p128 = scmp.eq.s32.totalorder %s30, 0
      %p129 = por %p127, %p128
      %s130 = ssub.s32 %s31, %s50
      %p131 = scmp.eq.s32.totalorder %s130, 0
      %s133 = sadd.s32 %s132, 1
      %s134 = scalar_select %p131, %s132, %s133
      %p137 = pneg %p131
      %p138 = scmp.eq.s32.totalorder %s24, 5
      %p139 = por %p137, %p138
      %p140 = scmp.ne.s32.totalorder %s132, %s135
      %p141 = scmp.eq.s32.totalorder %s24, 0
      %p142 = por %p140, %p141
      %p143 = scmp.ne.s32.totalorder %s132, %s135
      %p144 = scmp.eq.s32.totalorder %s29, 5
      %p145 = por %p143, %p144
      %p146 = scmp.ne.s32.totalorder %s135, %s136
      %p147 = scmp.eq.s32.totalorder %s29, 0
      %p148 = por %p146, %p147
      %p149 = scmp.ne.s32.totalorder %s135, %s136
      %p150 = scmp.eq.s32.totalorder %s30, 5
      %p151 = por %p149, %p150
      %p153 = scmp.ne.s32.totalorder %s136, %s152
      %p154 = scmp.eq.s32.totalorder %s30, 0
      %p155 = por %p153, %p154
      %s156 = ssub.s32 %s31, %s50
      %p157 = scmp.eq.s32.totalorder %s156, 0
      %s159 = sadd.s32 %s158, 1
      %s160 = scalar_select %p157, %s158, %s159
      %p163 = pneg %p157
      %p164 = scmp.eq.s32.totalorder %s24, 5
      %p165 = por %p163, %p164
      %p166 = scmp.ne.s32.totalorder %s158, %s161
      %p167 = scmp.eq.s32.totalorder %s24, 0
      %p168 = por %p166, %p167
      %p169 = scmp.ne.s32.totalorder %s158, %s161
      %p170 = scmp.eq.s32.totalorder %s29, 5
      %p171 = por %p169, %p170
      %p172 = scmp.ne.s32.totalorder %s161, %s162
      %p173 = scmp.eq.s32.totalorder %s29, 0
      %p174 = por %p172, %p173
      %p175 = scmp.ne.s32.totalorder %s161, %s162
      %p176 = scmp.eq.s32.totalorder %s30, 5
      %p177 = por %p175, %p176
      %p179 = scmp.ne.s32.totalorder %s162, %s178
      %p180 = scmp.eq.s32.totalorder %s30, 0
      %p181 = por %p179, %p180
      %s182 = ssub.s32 %s31, %s50
      %p183 = scmp.eq.s32.totalorder %s182, 0
      %s185 = sadd.s32 %s184, 1
      %s186 = scalar_select %p183, %s184, %s185
      %p189 = pneg %p183
      %p190 = scmp.eq.s32.totalorder %s24, 5
      %p191 = por %p189, %p190
      %p192 = scmp.ne.s32.totalorder %s184, %s187
      %p193 = scmp.eq.s32.totalorder %s24, 0
      %p194 = por %p192, %p193
      %p195 = scmp.ne.s32.totalorder %s184, %s187
      %p196 = scmp.eq.s32.totalorder %s29, 5
      %p197 = por %p195, %p196
      %p198 = scmp.ne.s32.totalorder %s187, %s188
      %p199 = scmp.eq.s32.totalorder %s29, 0
      %p200 = por %p198, %p199
      %p201 = scmp.ne.s32.totalorder %s187, %s188
      %p202 = scmp.eq.s32.totalorder %s30, 5
      %p203 = por %p201, %p202
      %p205 = scmp.ne.s32.totalorder %s188, %s204
      %p206 = scmp.eq.s32.totalorder %s30, 0
      %p207 = por %p205, %p206
      %s208 = ssub.s32 %s31, %s50
      %p209 = scmp.eq.s32.totalorder %s208, 0
      %s211 = sadd.s32 %s210, 1
      %s212 = scalar_select %p209, %s210, %s211
      %p215 = pneg %p209
      %p216 = scmp.eq.s32.totalorder %s24, 5
      %p217 = por %p215, %p216
      %p218 = scmp.ne.s32.totalorder %s210, %s213
      %p219 = scmp.eq.s32.totalorder %s24, 0
      %p220 = por %p218, %p219
      %p221 = scmp.ne.s32.totalorder %s210, %s213
      %p222 = scmp.eq.s32.totalorder %s29, 5
      %p223 = por %p221, %p222
      %p224 = scmp.ne.s32.totalorder %s213, %s214
      %p225 = scmp.eq.s32.totalorder %s29, 0
      %p226 = por %p224, %p225
      %p227 = scmp.ne.s32.totalorder %s213, %s214
      %p228 = scmp.eq.s32.totalorder %s30, 5
      %p229 = por %p227, %p228
      %p231 = scmp.ne.s32.totalorder %s214, %s230
      %p232 = scmp.eq.s32.totalorder %s30, 0
      %p233 = por %p231, %p232
      %s234 = ssub.s32 %s31, %s50
      %s235 = ssub.s32 %s33, %s42
      %s236 = sor.u32 %s234, %s235
      %p237 = scmp.eq.s32.totalorder %s236, 0
      %s239 = sadd.s32 %s238, 1
      %s240 = scalar_select %p237, %s238, %s239
      %p243 = pneg %p237
      %p244 = scmp.eq.s32.totalorder %s24, 5
      %p245 = por %p243, %p244
      %p246 = scmp.ne.s32.totalorder %s238, %s241
      %p247 = scmp.eq.s32.totalorder %s24, 0
      %p248 = por %p246, %p247
      %p249 = scmp.ne.s32.totalorder %s238, %s241
      %p250 = scmp.eq.s32.totalorder %s29, 5
      %p251 = por %p249, %p250
      %p252 = scmp.ne.s32.totalorder %s241, %s242
      %p253 = scmp.eq.s32.totalorder %s29, 0
      %p254 = por %p252, %p253
      %p255 = scmp.ne.s32.totalorder %s241, %s242
      %p256 = scmp.eq.s32.totalorder %s30, 5
      %p257 = por %p255, %p256
      %p259 = scmp.ne.s32.totalorder %s242, %s258
      %p260 = scmp.eq.s32.totalorder %s30, 0
      %p261 = por %p259, %p260
      %s262 = ssub.s32 %s31, %s50
      %p263 = scmp.eq.s32.totalorder %s262, 0
      %s265 = sadd.s32 %s264, 1
      %s266 = scalar_select %p263, %s264, %s265
      %p269 = pneg %p263
      %p270 = scmp.eq.s32.totalorder %s24, 5
      %p271 = por %p269, %p270
      %p272 = scmp.ne.s32.totalorder %s264, %s267
      %p273 = scmp.eq.s32.totalorder %s24, 0
      %p274 = por %p272, %p273
      %p275 = scmp.ne.s32.totalorder %s264, %s267
      %p276 = scmp.eq.s32.totalorder %s29, 5
      %p277 = por %p275, %p276
      %p278 = scmp.ne.s32.totalorder %s267, %s268
      %p279 = scmp.eq.s32.totalorder %s29, 0
      %p280 = por %p278, %p279
      %p281 = scmp.ne.s32.totalorder %s267, %s268
      %p282 = scmp.eq.s32.totalorder %s30, 5
      %p283 = por %p281, %p282
      %p285 = scmp.ne.s32.totalorder %s268, %s284
      %p286 = scmp.eq.s32.totalorder %s30, 0
      %p287 = por %p285, %p286
      %s288 = ssub.s32 %s31, %s50
      %s289 = ssub.s32 %s33, %s42
      %s290 = sor.u32 %s288, %s289
      %p291 = scmp.eq.s32.totalorder %s290, 0
      %s293 = sadd.s32 %s292, 1
      %s294 = scalar_select %p291, %s292, %s293
      %p297 = pneg %p291
      %p298 = scmp.eq.s32.totalorder %s24, 5
      %p299 = por %p297, %p298
      %p300 = scmp.ne.s32.totalorder %s292, %s295
      %p301 = scmp.eq.s32.totalorder %s24, 0
      %p302 = por %p300, %p301
      %p303 = scmp.ne.s32.totalorder %s292, %s295
      %p304 = scmp.eq.s32.totalorder %s29, 5
      %p305 = por %p303, %p304
      %p306 = scmp.ne.s32.totalorder %s295, %s296
      %p307 = scmp.eq.s32.totalorder %s29, 0
      %p308 = por %p306, %p307
      %p309 = scmp.ne.s32.totalorder %s295, %s296
      %p310 = scmp.eq.s32.totalorder %s30, 5
      %p311 = por %p309, %p310
      %p313 = scmp.ne.s32.totalorder %s296, %s312
      %p314 = scmp.eq.s32.totalorder %s30, 0
      %p315 = por %p313, %p314
      %s317 = sadd.s32 %s316, 1
      %p320 = scmp.eq.s32.totalorder %s24, 5
      %p321 = scmp.ne.s32.totalorder %s316, %s318
      %p322 = scmp.eq.s32.totalorder %s24, 0
      %p323 = por %p321, %p322
      %p324 = scmp.ne.s32.totalorder %s316, %s318
      %p325 = scmp.eq.s32.totalorder %s29, 5
      %p326 = por %p324, %p325
      %p327 = scmp.ne.s32.totalorder %s318, %s319
      %p328 = scmp.eq.s32.totalorder %s29, 0
      %p329 = por %p327, %p328
      %p330 = scmp.ne.s32.totalorder %s318, %s319
      %p331 = scmp.eq.s32.totalorder %s30, 5
      %p332 = por %p330, %p331
      %p334 = scmp.ne.s32.totalorder %s319, %s333
      %p335 = scmp.eq.s32.totalorder %s30, 0
      %p336 = por %p334, %p335
      %p337 = scmp.le.s32.totalorder 1, %s24
      %p338 = scmp.lt.s32.totalorder %s24, 7
      %p339 = pnand %p337, %p338
      %p340 = pneg %p339
      // Predicated region
      $region9: #{tpu_custom_call.1} parent=5 // pred_check
        _
      $region10: #{tpu_custom_call.1} parent=5 // pred_check_branch
        %342 = sbr.rel (%p339) target = $region12
      $region11: #{tpu_custom_call.1} parent=5 // pred_region
        %s343 = ssub.s32 %s24, 1
        // Predicated region
        $region13: #{tpu_custom_call.1} parent=11 // pred_check
          %p344 = pneg %p94
        $region14: #{tpu_custom_call.1} parent=11 // pred_check_branch
          %346 = sbr.rel (%p344) target = $region16
        $region15: #{tpu_custom_call.1} parent=11 // pred_region
          _
        $region16: #{tpu_custom_call.1} parent=11 // pred_fallthru
          _
      $region12: #{tpu_custom_call.1} parent=5 // pred_fallthru
        _
      %p347 = scmp.lt.s32.totalorder %s24, 6
      // Predicated region
      $region17: #{tpu_custom_call.1} parent=5 // pred_check
        %p348 = pneg %p347
      $region18: #{tpu_custom_call.1} parent=5 // pred_check_branch
        %350 = sbr.rel (%p348) target = $region20
      $region19: #{tpu_custom_call.1} parent=5 // pred_region
        // Predicated region
        $region21: #{tpu_custom_call.1} parent=19 // pred_check
          %p351 = pneg %p67
        $region22: #{tpu_custom_call.1} parent=19 // pred_check_branch
          %353 = sbr.rel (%p351) target = $region24
        $region23: #{tpu_custom_call.1} parent=19 // pred_region
          %s354 = ssub.s32 1, %s32
          %s355 = smul.u32 %s33, %s354
          %p356 = scmp.lt.s32.totalorder %s355, 0
          %s357 = scalar_select %p356, %s355, 0
          %s358 = smul.addr %s357, 8
          %s359 = scalar_lea.vmem %s0, %s358
          %s360 = ssub.s32 1, %s32
          %s361 = smul.u32 %s33, %s360
        $region24: #{tpu_custom_call.1} parent=19 // pred_fallthru
          _
        // Predicated region
        $region25: #{tpu_custom_call.1} parent=19 // pred_check
          %p362 = pneg %p116
        $region26: #{tpu_custom_call.1} parent=19 // pred_check_branch
          %364 = sbr.rel (%p362) target = $region28
        $region27: #{tpu_custom_call.1} parent=19 // pred_region
          %s365 = smul.u32 %s33, %s32
          %p366 = scmp.lt.s32.totalorder %s365, 0
          %s367 = scalar_select %p366, %s365, 0
          %s368 = smul.addr %s367, 2
          %s369 = scalar_lea.vmem %s2, %s368
          %s370 = smul.u32 %s33, %s32
        $region28: #{tpu_custom_call.1} parent=19 // pred_fallthru
          _
        // Predicated region
        $region29: #{tpu_custom_call.1} parent=19 // pred_check
          %p371 = pneg %p142
        $region30: #{tpu_custom_call.1} parent=19 // pred_check_branch
          %373 = sbr.rel (%p371) target = $region32
        $region31: #{tpu_custom_call.1} parent=19 // pred_region
          %p374 = scmp.lt.s32.totalorder %s31, 2
          %s375 = scalar_select %p374, %s31, 2
          %s376 = smul.addr %s375, 4
          %s377 = smul.addr %s376, 4
          %s378 = scalar_lea.vmem %s3, %s377
        $region32: #{tpu_custom_call.1} parent=19 // pred_fallthru
          _
        // Predicated region
        $region33: #{tpu_custom_call.1} parent=19 // pred_check
          %p379 = pneg %p168
        $region34: #{tpu_custom_call.1} parent=19 // pred_check_branch
          %381 = sbr.rel (%p379) target = $region36
        $region35: #{tpu_custom_call.1} parent=19 // pred_region
          %p382 = scmp.lt.s32.totalorder %s31, 2
          %s383 = scalar_select %p382, %s31, 2
          %s384 = smul.addr %s383, 4
          %s385 = smul.addr %s384, 4
          %s386 = scalar_lea.vmem %s4, %s385
        $region36: #{tpu_custom_call.1} parent=19 // pred_fallthru
          _
        // Predicated region
        $region37: #{tpu_custom_call.1} parent=19 // pred_check
          %p387 = pneg %p194
        $region38: #{tpu_custom_call.1} parent=19 // pred_check_branch
          %389 = sbr.rel (%p387) target = $region40
        $region39: #{tpu_custom_call.1} parent=19 // pred_region
          %p390 = scmp.lt.s32.totalorder %s31, 2
          %s391 = scalar_select %p390, %s31, 2
          %s392 = smul.addr %s391, 4
          %s393 = scalar_lea.vmem %s5, %s392
        $region40: #{tpu_custom_call.1} parent=19 // pred_fallthru
          _
        // Predicated region
        $region41: #{tpu_custom_call.1} parent=19 // pred_check
          %p394 = pneg %p220
        $region42: #{tpu_custom_call.1} parent=19 // pred_check_branch
          %396 = sbr.rel (%p394) target = $region44
        $region43: #{tpu_custom_call.1} parent=19 // pred_region
          %p397 = scmp.lt.s32.totalorder %s31, 2
          %s398 = scalar_select %p397, %s31, 2
          %s399 = smul.addr %s398, 48
          %s400 = smul.addr %s399, 4
          %s401 = scalar_lea.vmem %s6, %s400
        $region44: #{tpu_custom_call.1} parent=19 // pred_fallthru
          _
      $region20: #{tpu_custom_call.1} parent=5 // pred_fallthru
        _
      %p402 = scmp.le.s32.totalorder 1, %s24
      %p403 = scmp.lt.s32.totalorder %s24, 7
      %p404 = pnand %p402, %p403
      %p405 = pneg %p404
      // Predicated region
      $region45: #{tpu_custom_call.1} parent=5 // pred_check
        _
      $region46: #{tpu_custom_call.1} parent=5 // pred_check_branch
        %407 = sbr.rel (%p404) target = $region48
      $region47: #{tpu_custom_call.1} parent=5 // pred_region
        %s408 = ssub.s32 %s24, 1
        %s409 = ssub.s32 1, %s35
        %s410 = smul.u32 %s36, %s409
        %p411 = scmp.lt.s32.totalorder %s410, 0
        %s412 = scalar_select %p411, %s410, 0
        %s413 = smul.addr %s412, 8
        %s414 = scalar_lea.vmem %s0, %s413
        %p415 = pneg %p73
        %p416 = pneg %p70
        %p417 = pneg %p94
        %p418 = pneg %p91
        %s419 = smul.u32 %s36, %s35
        %p420 = scmp.lt.s32.totalorder %s419, 0
        %s421 = scalar_select %p420, %s419, 0
        %s422 = smul.addr %s421, 2
        %s423 = scalar_lea.vmem %s2, %s422
        %p424 = pneg %p122
        %p425 = pneg %p119
        %p426 = scmp.lt.s32.totalorder %s34, 2
        %s427 = scalar_select %p426, %s34, 2
        %s428 = smul.addr %s427, 4
        %s429 = smul.addr %s428, 4
        %s430 = scalar_lea.vmem %s3, %s429
        %p431 = pneg %p148
        %p432 = pneg %p145
        %p433 = scmp.lt.s32.totalorder %s34, 2
        %s434 = scalar_select %p433, %s34, 2
        %s435 = smul.addr %s434, 4
        %s436 = smul.addr %s435, 4
        %s437 = scalar_lea.vmem %s4, %s436
        %p438 = pneg %p174
        %p439 = pneg %p171
        %p440 = scmp.lt.s32.totalorder %s34, 2
        %s441 = scalar_select %p440, %s34, 2
        %s442 = smul.addr %s441, 4
        %s443 = scalar_lea.vmem %s5, %s442
        %p444 = pneg %p200
        %p445 = pneg %p197
        %p446 = scmp.lt.s32.totalorder %s34, 2
        %s447 = scalar_select %p446, %s34, 2
        %s448 = smul.addr %s447, 48
        %s449 = smul.addr %s448, 4
        %s450 = scalar_lea.vmem %s6, %s449
        %p451 = pneg %p226
        %p452 = pneg %p223
        %p453 = pneg %p254
        %p454 = pneg %p251
        %s455 = sand.u32 %s241, 1
        %s456 = scalar_lea.sflag [#allocation6], %s455
        %s457 = sand.u32 %s241, 1
        %s458 = smul.addr %s457, 32
        %s459 = scalar_lea.vmem [#allocation5], %s458
        %p460 = pneg %p280
        %p461 = pneg %p277
        %s462 = sand.u32 %s267, 1
        %s463 = scalar_lea.sflag [#allocation9], %s462
        %s464 = sand.u32 %s267, 1
        %s465 = smul.addr %s464, 4
        %s466 = scalar_lea.vmem [#allocation8], %s465
        %p467 = pneg %p308
        %p468 = pneg %p305
        %s469 = smul.u32 4, %s36
        %p470 = scmp.lt.s32.totalorder %s34, 2
        %s471 = scalar_select %p470, %s34, 2
        %p472 = scmp.lt.s32.totalorder %s469, 3
        %s473 = scalar_select %p472, %s469, 3
        %s474 = smul.addr %s471, 4
        %s475 = sadd.s32 %s473, %s474
        %s476 = smul.addr %s475, 8
        %s477 = scalar_lea.vmem %s9, %s476
        %p478 = pneg %p329
        %p479 = pneg %p326
        %s480 = ssub.s32 1, %s35
        %s481 = smul.u32 %s36, %s480
        %p482 = scmp.lt.s32.totalorder %s481, 0
        %s483 = scalar_select %p482, %s481, 0
        %s484 = smul.addr %s483, 8
        %s485 = scalar_lea.vmem %s0, %s484
        %s486 = ssub.s32 1, %s35
        %s487 = smul.u32 %s36, %s486
        %s488 = smul.u32 %s36, %s35
        %p489 = scmp.lt.s32.totalorder %s488, 0
        %s490 = scalar_select %p489, %s488, 0
        %s491 = smul.addr %s490, 2
        %s492 = scalar_lea.vmem %s2, %s491
        %s493 = smul.u32 %s36, %s35
        %p494 = scmp.lt.s32.totalorder %s34, 2
        %s495 = scalar_select %p494, %s34, 2
        %s496 = smul.addr %s495, 4
        %s497 = smul.addr %s496, 4
        %s498 = scalar_lea.vmem %s3, %s497
        %p499 = scmp.lt.s32.totalorder %s34, 2
        %s500 = scalar_select %p499, %s34, 2
        %s501 = smul.addr %s500, 4
        %s502 = smul.addr %s501, 4
        %s503 = scalar_lea.vmem %s4, %s502
        %p504 = scmp.lt.s32.totalorder %s34, 2
        %s505 = scalar_select %p504, %s34, 2
        %s506 = smul.addr %s505, 4
        %s507 = scalar_lea.vmem %s5, %s506
        %p508 = scmp.lt.s32.totalorder %s34, 2
        %s509 = scalar_select %p508, %s34, 2
        %s510 = smul.addr %s509, 48
        %s511 = smul.addr %s510, 4
        %s512 = scalar_lea.vmem %s6, %s511
        %s513 = smul.u32 4, %s36
        %s514 = smul.u32 4, %s36
        %p515 = scmp.lt.s32.totalorder %s34, 2
        %s516 = scalar_select %p515, %s34, 2
        %p517 = scmp.lt.s32.totalorder %s514, 3
        %s518 = scalar_select %p517, %s514, 3
        %s519 = smul.addr %s516, 4
        %s520 = sadd.s32 %s518, %s519
        %s521 = smul.addr %s520, 8
        %s522 = scalar_lea.vmem %s9, %s521
        %s523 = smul.u32 4, %s36
        %s525 = smul.u32 %s36, 32
        %v526 = vlaneseq
        %v527 = vshrl.u32 %v526, 7
        %v528 = vadd.s32 %v527, 8
        %v529 = vadd.s32 %v527, 16
        %v530 = vadd.s32 %v527, 24
        %v531 = vstv %s525
        %v532 = vadd.s32 %v531, %v527
        %v533 = vadd.s32 %v531, %v528
        %v534 = vadd.s32 %v531, %v529
        %v535 = vadd.s32 %v531, %v530
        %vm536 = vcmp.lt.s32.totalorder %v532, 32
        %vm537 = vcmp.lt.s32.totalorder %v533, 32
        %vm538 = vcmp.lt.s32.totalorder %v534, 32
        %vm539 = vcmp.lt.s32.totalorder %v535, 32
        %v540 = vsel %vm536, 1, 0
        %v541 = vsel %vm537, 1, 0
        %v542 = vsel %vm538, 1, 0
        %v543 = vsel %vm539, 1, 0
        %v544 = vcvt.s32.f32 %v540
        %v545 = vcvt.s32.f32 %v541
        %v546 = vcvt.s32.f32 %v542
        %v547 = vcvt.s32.f32 %v543
        %p548 = scmp.eq.s32.totalorder %s34, 0
        %p549 = scmp.eq.s32.totalorder %s35, 0
        %p550 = pnand %p548, %p549
        %p551 = pneg %p550
        %p552 = scmp.eq.s32.totalorder %s36, 0
        %p553 = pnand %p551, %p552
        %p554 = pneg %p553
        // Predicated region
        $region49: #{tpu_custom_call.1} parent=47 // pred_check
          _
        $region50: #{tpu_custom_call.1} parent=47 // pred_check_branch
          %556 = sbr.rel (%p553) target = $region52
        $region51: #{tpu_custom_call.1} parent=47 // pred_region
          %v557 = vld [vmem:[%s1] sm:$0xf]
          %v558 = vld [vmem:[%s1 + $0x4] sm:$0xf]
          %v559 = vld [vmem:[%s1 + $0x8] sm:$0xf]
          %v560 = vld [vmem:[%s1 + $0xc] sm:$0xf]
          %vm561 = vcmask 257024
          %562 = vst.msk [vmem:[#allocation2] sm:$0xf] %vm561, %v557
          %563 = vst.msk [vmem:[#allocation2 + $0x4] sm:$0xf] %vm561, %v558
          %564 = vst.msk [vmem:[#allocation2 + $0x8] sm:$0xf] %vm561, %v559
          %565 = vst.msk [vmem:[#allocation2 + $0xc] sm:$0xf] %vm561, %v560
          %s566 = scalar_lea.smem [#allocation10], 0
          %567 = sst [smem:[%s566]] 0.0
        $region52: #{tpu_custom_call.1} parent=47 // pred_fallthru
          _
        %p568 = pnand %p549, %p552
        %p569 = pneg %p568
        // Predicated region
        $region53: #{tpu_custom_call.1} parent=47 // pred_check
          _
        $region54: #{tpu_custom_call.1} parent=47 // pred_check_branch
          %571 = sbr.rel (%p568) target = $region56
        $region55: #{tpu_custom_call.1} parent=47 // pred_region
          %vm572 = vcmask 254976
          %573 = vst.msk [vmem:[#allocation4] sm:$0x3] %vm572, 0.0
          %vm574 = vcmask 257024
          %575 = vst.msk [vmem:[%s466] sm:$0xf] %vm574, 0.0
        $region56: #{tpu_custom_call.1} parent=47 // pred_fallthru
          _
        // Predicated region
        $region57: #{tpu_custom_call.1} parent=47 // pred_check
          %p576 = pneg %p549
        $region58: #{tpu_custom_call.1} parent=47 // pred_check_branch
          %578 = sbr.rel (%p576) target = $region60
        $region59: #{tpu_custom_call.1} parent=47 // pred_region
          %v579 = vld [vmem:[%s485] sm:$0xff]
          %v580 = vunpack.c.l.s8.bf16 %v579
          %v581 = vunpack.c.h.s8.bf16 %v579
          %v582 = vld [vmem:[#allocation2] sm:$0xf]
          %v583 = vld [vmem:[#allocation2 + $0x4] sm:$0xf]
          %v584 = vld [vmem:[#allocation2 + $0x8] sm:$0xf]
          %v585 = vld [vmem:[#allocation2 + $0xc] sm:$0xf]
          %v590 = vunpack.c.l.b16 %v582
          %v591 = vunpack.c.l.b16 %v583
          %v592 = vunpack.c.l.b16 %v584
          %v593 = vunpack.c.l.b16 %v585
          %v594 = vpack.c.b16 %v591, %v590
          %v595 = vpack.c.b16 %v593, %v592
          %vm598 = vcmask 261120
          %v600 = vsel %vm598, %v580, 0
          %v603 = vsel %vm598, %v581, 0
          %605 = vmatprep.subr.bf16.mxu0 0
          %606 = vmatpush1.bf16.msra.mxu0 0
          %607 = vmatprep.subr.bf16.mxu0 0
          %608 = vmatpush1.bf16.msra.mxu0 0
          %609 = vmatprep.subr.bf16.mxu0 0
          %610 = vmatpush1.bf16.msra.mxu0 0
          %611 = vmatprep.subr.bf16.mxu0 0
          %612 = vmatpush1.bf16.msra.mxu0 0
          %613 = vmatprep.subr.bf16.mxu0 0
          %614 = vmatpush1.bf16.msra.mxu0 0
          %615 = vmatprep.subr.bf16.mxu0 0
          %616 = vmatpush1.bf16.msra.mxu0 0
          %617 = vmatprep.subr.bf16.mxu0 0
          %618 = vmatpush1.bf16.msra.mxu0 %v595
          %619 = vmatprep.subr.bf16.mxu0 0
          %620 = vmatpush1.bf16.msra.mxu0 %v594
          %621 = vmatprep.subr.bf16.mxu0 0
          %622 = vmatpush2.bf16.msra.mxu0 0
          %623 = vmatprep.subr.bf16.mxu0 0
          %624 = vmatpush2.bf16.msra.mxu0 0
          %625 = vmatprep.subr.bf16.mxu0 0
          %626 = vmatpush2.bf16.msra.mxu0 0
          %627 = vmatprep.subr.bf16.mxu0 0
          %628 = vmatpush2.bf16.msra.mxu0 0
          %629 = vmatprep.subr.bf16.mxu0 0
          %630 = vmatpush2.bf16.msra.mxu0 0
          %631 = vmatprep.subr.bf16.mxu0 0
          %632 = vmatpush2.bf16.msra.mxu0 0
          %633 = vmatprep.subr.bf16.mxu0 0
          %634 = vmatpush2.bf16.msra.mxu0 0
          %635 = vmatprep.subr.bf16.mxu0 0
          %636 = vmatpush2.bf16.msra.mxu0 0
          %637 = vmatprep.mubr.bf16.mxu0 0
          %638 = vmatmul.mubr.bf16.gmra.mxu0 %v600
          %v639 = vpop.f32.mrf.mxu0
          %v640 = vadd.f32 0.0, %v639
          %v641 = vpop.f32.mrf.mxu0
          %v642 = vpop.f32.mrf.mxu0
          %v643 = vadd.f32 0.0, %v642
          %v644 = vpop.f32.mrf.mxu0
          %645 = vmatprep.mubr.bf16.mxu0 0
          %646 = vmatmul.mubr.bf16.gmra.mxu0 %v603
          %v647 = vpop.f32.mrf.mxu0
          %v648 = vadd.f32 0.0, %v647
          %v649 = vpop.f32.mrf.mxu0
          %v650 = vpop.f32.mrf.mxu0
          %v651 = vadd.f32 0.0, %v650
          %v652 = vpop.f32.mrf.mxu0
          %653 = vdwg.mxu0
          %v654 = vpack.c.bf16 %v643, %v640
          %v655 = vpack.c.bf16 %v651, %v648
          %v656 = vld [vmem:[%s498] sm:$0xf]
          %v657 = vld [vmem:[%s498 + $0x4] sm:$0xf]
          %v658 = vld [vmem:[%s498 + $0x8] sm:$0xf]
          %v659 = vld [vmem:[%s498 + $0xc] sm:$0xf]
          %v660 = vld [vmem:[%s507] sm:$0x1]
          %v661 = vlaneseq
          %v662 = vshrl.u32 %v661, 7
          %v663 = vsub.s32 0, %v662
          %v664 = vrot.slane %v660, %v663
          %v669 = vunpack.c.l.b16 %v656
          %v670 = vunpack.c.l.b16 %v657
          %v671 = vunpack.c.l.b16 %v658
          %v672 = vunpack.c.l.b16 %v659
          %v673 = vpack.c.b16 %v670, %v669
          %v674 = vpack.c.b16 %v672, %v671
          %v678 = vsel %vm598, %v654, 0
          %v681 = vsel %vm598, %v655, 0
          %683 = vmatprep.subr.bf16.mxu0 0
          %684 = vmatpush1.bf16.msra.mxu0 0
          %685 = vmatprep.subr.bf16.mxu0 0
          %686 = vmatpush1.bf16.msra.mxu0 0
          %687 = vmatprep.subr.bf16.mxu0 0
          %688 = vmatpush1.bf16.msra.mxu0 0
          %689 = vmatprep.subr.bf16.mxu0 0
          %690 = vmatpush1.bf16.msra.mxu0 0
          %691 = vmatprep.subr.bf16.mxu0 0
          %692 = vmatpush1.bf16.msra.mxu0 0
          %693 = vmatprep.subr.bf16.mxu0 0
          %694 = vmatpush1.bf16.msra.mxu0 0
          %695 = vmatprep.subr.bf16.mxu0 0
          %696 = vmatpush1.bf16.msra.mxu0 %v674
          %697 = vmatprep.subr.bf16.mxu0 0
          %698 = vmatpush1.bf16.msra.mxu0 %v673
          %699 = vmatprep.subr.bf16.mxu0 0
          %700 = vmatpush2.bf16.msra.mxu0 0
          %701 = vmatprep.subr.bf16.mxu0 0
          %702 = vmatpush2.bf16.msra.mxu0 0
          %703 = vmatprep.subr.bf16.mxu0 0
          %704 = vmatpush2.bf16.msra.mxu0 0
          %705 = vmatprep.subr.bf16.mxu0 0
          %706 = vmatpush2.bf16.msra.mxu0 0
          %707 = vmatprep.subr.bf16.mxu0 0
          %708 = vmatpush2.bf16.msra.mxu0 0
          %709 = vmatprep.subr.bf16.mxu0 0
          %710 = vmatpush2.bf16.msra.mxu0 0
          %711 = vmatprep.subr.bf16.mxu0 0
          %712 = vmatpush2.bf16.msra.mxu0 0
          %713 = vmatprep.subr.bf16.mxu0 0
          %714 = vmatpush2.bf16.msra.mxu0 0
          %715 = vmatprep.mubr.bf16.mxu0 0
          %716 = vmatmul.mubr.bf16.gmra.mxu0 %v678
          %v717 = vpop.f32.mrf.mxu0
          %v718 = vadd.f32 %v664, %v717
          %v719 = vpop.f32.mrf.mxu0
          %v720 = vpop.f32.mrf.mxu0
          %v721 = vadd.f32 %v664, %v720
          %v722 = vpop.f32.mrf.mxu0
          %723 = vmatprep.mubr.bf16.mxu0 0
          %724 = vmatmul.mubr.bf16.gmra.mxu0 %v681
          %v725 = vpop.f32.mrf.mxu0
          %v726 = vadd.f32 %v664, %v725
          %v727 = vpop.f32.mrf.mxu0
          %v728 = vpop.f32.mrf.mxu0
          %v729 = vadd.f32 %v664, %v728
          %v730 = vpop.f32.mrf.mxu0
          %731 = vdwg.mxu0
          %v732 = vmax.f32 %v718, 0.0
          %v733 = vmax.f32 %v721, 0.0
          %v734 = vmax.f32 %v726, 0.0
          %v735 = vmax.f32 %v729, 0.0
          %v736 = vpack.c.bf16 %v733, %v732
          %v737 = vpack.c.bf16 %v735, %v734
          %v738 = vld [vmem:[%s503] sm:$0xf]
          %v739 = vld [vmem:[%s503 + $0x4] sm:$0xf]
          %v740 = vld [vmem:[%s503 + $0x8] sm:$0xf]
          %v741 = vld [vmem:[%s503 + $0xc] sm:$0xf]
          %v742 = vld [vmem:[%s507 + $0x1] sm:$0x1]
          %v743 = vlaneseq
          %v744 = vshrl.u32 %v743, 7
          %v745 = vsub.s32 0, %v744
          %v746 = vrot.slane %v742, %v745
          %v751 = vunpack.c.l.b16 %v738
          %v752 = vunpack.c.l.b16 %v739
          %v753 = vunpack.c.l.b16 %v740
          %v754 = vunpack.c.l.b16 %v741
          %v755 = vpack.c.b16 %v752, %v751
          %v756 = vpack.c.b16 %v754, %v753
          %v760 = vsel %vm598, %v736, 0
          %v763 = vsel %vm598, %v737, 0
          %765 = vmatprep.subr.bf16.mxu0 0
          %766 = vmatpush1.bf16.msra.mxu0 0
          %767 = vmatprep.subr.bf16.mxu0 0
          %768 = vmatpush1.bf16.msra.mxu0 0
          %769 = vmatprep.subr.bf16.mxu0 0
          %770 = vmatpush1.bf16.msra.mxu0 0
          %771 = vmatprep.subr.bf16.mxu0 0
          %772 = vmatpush1.bf16.msra.mxu0 0
          %773 = vmatprep.subr.bf16.mxu0 0
          %774 = vmatpush1.bf16.msra.mxu0 0
          %775 = vmatprep.subr.bf16.mxu0 0
          %776 = vmatpush1.bf16.msra.mxu0 0
          %777 = vmatprep.subr.bf16.mxu0 0
          %778 = vmatpush1.bf16.msra.mxu0 %v756
          %779 = vmatprep.subr.bf16.mxu0 0
          %780 = vmatpush1.bf16.msra.mxu0 %v755
          %781 = vmatprep.subr.bf16.mxu0 0
          %782 = vmatpush2.bf16.msra.mxu0 0
          %783 = vmatprep.subr.bf16.mxu0 0
          %784 = vmatpush2.bf16.msra.mxu0 0
          %785 = vmatprep.subr.bf16.mxu0 0
          %786 = vmatpush2.bf16.msra.mxu0 0
          %787 = vmatprep.subr.bf16.mxu0 0
          %788 = vmatpush2.bf16.msra.mxu0 0
          %789 = vmatprep.subr.bf16.mxu0 0
          %790 = vmatpush2.bf16.msra.mxu0 0
          %791 = vmatprep.subr.bf16.mxu0 0
          %792 = vmatpush2.bf16.msra.mxu0 0
          %793 = vmatprep.subr.bf16.mxu0 0
          %794 = vmatpush2.bf16.msra.mxu0 0
          %795 = vmatprep.subr.bf16.mxu0 0
          %796 = vmatpush2.bf16.msra.mxu0 0
          %797 = vmatprep.mubr.bf16.mxu0 0
          %798 = vmatmul.mubr.bf16.gmra.mxu0 %v760
          %v799 = vpop.f32.mrf.mxu0
          %v800 = vadd.f32 %v746, %v799
          %v801 = vpop.f32.mrf.mxu0
          %v802 = vpop.f32.mrf.mxu0
          %v803 = vadd.f32 %v746, %v802
          %v804 = vpop.f32.mrf.mxu0
          %805 = vmatprep.mubr.bf16.mxu0 0
          %806 = vmatmul.mubr.bf16.gmra.mxu0 %v763
          %v807 = vpop.f32.mrf.mxu0
          %v808 = vadd.f32 %v746, %v807
          %v809 = vpop.f32.mrf.mxu0
          %v810 = vpop.f32.mrf.mxu0
          %v811 = vadd.f32 %v746, %v810
          %v812 = vpop.f32.mrf.mxu0
          %813 = vdwg.mxu0
          %v814 = vmax.f32 %v800, 0.0
          %v815 = vmax.f32 %v803, 0.0
          %v816 = vmax.f32 %v808, 0.0
          %v817 = vmax.f32 %v811, 0.0
          %s818 = scalar_lea.vmem [#allocation3], %s525
          %819 = vst.msk [vmem:[%s818] sm:$0xff] %vm598, %v814
          %820 = vst.msk [vmem:[%s818 + $0x8] sm:$0xff] %vm598, %v815
          %821 = vst.msk [vmem:[%s818 + $0x10] sm:$0xff] %vm598, %v816
          %822 = vst.msk [vmem:[%s818 + $0x18] sm:$0xff] %vm598, %v817
          %v823 = vmul.f32 %v814, %v544
          %v824 = vmul.f32 %v815, %v545
          %v825 = vmul.f32 %v816, %v546
          %v826 = vmul.f32 %v817, %v547
          %v827 = vld [vmem:[#allocation4] sm:$0x1]
          %v828 = vsel %vm598, %v823, 0.0
          %v829 = vsel %vm598, %v824, 0.0
          %v830 = vadd.f32 %v828, %v829
          %v831 = vsel %vm598, %v825, 0.0
          %v832 = vadd.f32 %v830, %v831
          %v833 = vsel %vm598, %v826, 0.0
          %v834 = vadd.f32 %v832, %v833
          %v835 = vrot.slane %v834, 4
          %v836 = vadd.f32 %v834, %v835
          %v837 = vrot.slane %v836, 2
          %v838 = vadd.f32 %v836, %v837
          %v839 = vrot.slane %v838, 1
          %v840 = vadd.f32 %v838, %v839
          %v841 = vadd.f32 %v827, %v840
          %vm842 = vcmask 253952
          %843 = vst.msk [vmem:[#allocation4] sm:$0x1] %vm842, %v841
          %v844 = vld [vmem:[#allocation4 + $0x1] sm:$0x1]
          %v845 = vmul.f32 %v823, %v814
          %v846 = vmul.f32 %v824, %v815
          %v847 = vmul.f32 %v825, %v816
          %v848 = vmul.f32 %v826, %v817
          %v849 = vsel %vm598, %v845, 0.0
          %v850 = vsel %vm598, %v846, 0.0
          %v851 = vadd.f32 %v849, %v850
          %v852 = vsel %vm598, %v847, 0.0
          %v853 = vadd.f32 %v851, %v852
          %v854 = vsel %vm598, %v848, 0.0
          %v855 = vadd.f32 %v853, %v854
          %v856 = vrot.slane %v855, 4
          %v857 = vadd.f32 %v855, %v856
          %v858 = vrot.slane %v857, 2
          %v859 = vadd.f32 %v857, %v858
          %v860 = vrot.slane %v859, 1
          %v861 = vadd.f32 %v859, %v860
          %v862 = vadd.f32 %v844, %v861
          %863 = vst.msk [vmem:[#allocation4 + $0x1] sm:$0x1] %vm842, %v862
          %864 = vst.msk [vmem:[%s459] sm:$0xff] %vm598, %v814
          %865 = vst.msk [vmem:[%s459 + $0x8] sm:$0xff] %vm598, %v815
          %866 = vst.msk [vmem:[%s459 + $0x10] sm:$0xff] %vm598, %v816
          %867 = vst.msk [vmem:[%s459 + $0x18] sm:$0xff] %vm598, %v817
          %vm868 = vcmask 23552
          %869 = vst.msk [vmem:[%s522] sm:$0xff] %vm868, 0
          %870 = vst.msk [vmem:[%s522 + $0x8] sm:$0xff] %vm868, 0
          %871 = vst.msk [vmem:[%s522 + $0x10] sm:$0xff] %vm868, 0
          %872 = vst.msk [vmem:[%s522 + $0x18] sm:$0xff] %vm868, 0
        $region60: #{tpu_custom_call.1} parent=47 // pred_fallthru
          _
        %p873 = scmp.eq.s32.totalorder %s35, 1
        // Predicated region
        $region61: #{tpu_custom_call.1} parent=47 // pred_check
          %p874 = pneg %p873
        $region62: #{tpu_custom_call.1} parent=47 // pred_check_branch
          %876 = sbr.rel (%p874) target = $region64
        $region63: #{tpu_custom_call.1} parent=47 // pred_region
          %s877 = scalar_lea.vmem [#allocation3], %s525
          %v878 = vld [vmem:[%s877] sm:$0xff]
          %v879 = vld [vmem:[%s877 + $0x8] sm:$0xff]
          %v880 = vld [vmem:[%s877 + $0x10] sm:$0xff]
          %v881 = vld [vmem:[%s877 + $0x18] sm:$0xff]
          %v882 = vld [vmem:[#allocation4] sm:$0x1]
          %v883 = vmul.f32 %v882, 0.03125
          %v884 = vld [vmem:[#allocation4 + $0x1] sm:$0x1]
          %v885 = vmul.f32 %v884, 0.03125
          %v886 = vmul.f32 %v883, %v883
          %v887 = vsub.f32 %v885, %v886
          %v888 = vlaneseq
          %v889 = vshrl.u32 %v888, 7
          %v890 = vsub.s32 0, %v889
          %v891 = vrot.slane %v883, %v890
          %v892 = vsub.f32 %v878, %v891
          %v893 = vsub.f32 %v879, %v891
          %v894 = vsub.f32 %v880, %v891
          %v895 = vsub.f32 %v881, %v891
          %v896 = vadd.f32 %v887, 1e-05
          %v897 = vrsqrt.pop %v896
          %v898 = vlaneseq
          %v899 = vshrl.u32 %v898, 7
          %v900 = vsub.s32 0, %v899
          %v901 = vrot.slane %v897, %v900
          %v902 = vmul.f32 %v892, %v901
          %v903 = vmul.f32 %v893, %v901
          %v904 = vmul.f32 %v894, %v901
          %v905 = vmul.f32 %v895, %v901
          %v906 = vld [vmem:[%s507 + $0x2] sm:$0x1]
          %v907 = vlaneseq
          %v908 = vshrl.u32 %v907, 7
          %v909 = vsub.s32 0, %v908
          %v910 = vrot.slane %v906, %v909
          %v911 = vmul.f32 %v902, %v910
          %v912 = vmul.f32 %v903, %v910
          %v913 = vmul.f32 %v904, %v910
          %v914 = vmul.f32 %v905, %v910
          %v915 = vld [vmem:[%s507 + $0x3] sm:$0x1]
          %v916 = vlaneseq
          %v917 = vshrl.u32 %v916, 7
          %v918 = vsub.s32 0, %v917
          %v919 = vrot.slane %v915, %v918
          %v920 = vadd.f32 %v911, %v919
          %v921 = vadd.f32 %v912, %v919
          %v922 = vadd.f32 %v913, %v919
          %v923 = vadd.f32 %v914, %v919
          %vm924 = vcmask 261120
          %925 = vst.msk [vmem:[%s459] sm:$0xff] %vm924, %v920
          %926 = vst.msk [vmem:[%s459 + $0x8] sm:$0xff] %vm924, %v921
          %927 = vst.msk [vmem:[%s459 + $0x10] sm:$0xff] %vm924, %v922
          %928 = vst.msk [vmem:[%s459 + $0x18] sm:$0xff] %vm924, %v923
          %v929 = vpack.c.bf16 %v921, %v920
          %v930 = vpack.c.bf16 %v923, %v922
          %v933 = vunpack.c.l.b16 %v929
          %v934 = vunpack.c.h.b16 %v929
          %v935 = vunpack.c.l.b16 %v930
          %v936 = vunpack.c.h.b16 %v930
          %v937 = vpack.c.b16 %v933, %v933
          %v938 = vpack.c.b16 %v934, %v934
          %v939 = vpack.c.b16 %v935, %v935
          %v940 = vpack.c.b16 %v936, %v936
          %s945 = sshra.s32 %s525, 3
          %s946 = sand.u32 %s525, 7
          %s947 = smul.addr %s945, 4
          %s948 = scalar_lea.vmem [#allocation2], %s947
          %vm949 = vcmask 257024
          %950 = vst.msk [vmem:[%s948] sm:$0xf] %vm949, %v937
          %951 = vst.msk [vmem:[%s948 + $0x4] sm:$0xf] %vm949, %v938
          %952 = vst.msk [vmem:[%s948 + $0x8] sm:$0xf] %vm949, %v939
          %953 = vst.msk [vmem:[%s948 + $0xc] sm:$0xf] %vm949, %v940
          %v954 = vld [vmem:[%s466] sm:$0xf]
          %v955 = vld [vmem:[%s492] sm:$0x3]
          %v957 = vsel %vm924, %v955, 0
          %959 = vmatprep.subr.bf16.mxu0 0
          %960 = vmatpush1.bf16.msra.mxu0 0
          %961 = vmatprep.subr.bf16.mxu0 0
          %962 = vmatpush1.bf16.msra.mxu0 0
          %963 = vmatprep.subr.bf16.mxu0 0
          %964 = vmatpush1.bf16.msra.mxu0 0
          %965 = vmatprep.subr.bf16.mxu0 0
          %966 = vmatpush1.bf16.msra.mxu0 0
          %967 = vmatprep.subr.bf16.mxu0 0
          %968 = vmatpush1.bf16.msra.mxu0 0
          %969 = vmatprep.subr.bf16.mxu0 0
          %970 = vmatpush1.bf16.msra.mxu0 0
          %971 = vmatprep.subr.bf16.mxu0 0
          %972 = vmatpush1.bf16.msra.mxu0 %v930
          %973 = vmatprep.subr.bf16.mxu0 0
          %974 = vmatpush1.bf16.msra.mxu0 %v929
          %975 = vmatprep.subr.bf16.mxu0 0
          %976 = vmatpush2.bf16.msra.mxu0 0
          %977 = vmatprep.subr.bf16.mxu0 0
          %978 = vmatpush2.bf16.msra.mxu0 0
          %979 = vmatprep.subr.bf16.mxu0 0
          %980 = vmatpush2.bf16.msra.mxu0 0
          %981 = vmatprep.subr.bf16.mxu0 0
          %982 = vmatpush2.bf16.msra.mxu0 0
          %983 = vmatprep.subr.bf16.mxu0 0
          %984 = vmatpush2.bf16.msra.mxu0 0
          %985 = vmatprep.subr.bf16.mxu0 0
          %986 = vmatpush2.bf16.msra.mxu0 0
          %987 = vmatprep.subr.bf16.mxu0 0
          %988 = vmatpush2.bf16.msra.mxu0 0
          %989 = vmatprep.subr.bf16.mxu0 0
          %990 = vmatpush2.bf16.msra.mxu0 0
          %991 = vmatprep.mubr.bf16.mxu0 0
          %992 = vmatmul.mubr.bf16.gmra.mxu0 %v957
          %v993 = vpop.f32.mrf.mxu0
          %v994 = vadd.f32 0.0, %v993
          %v995 = vpop.f32.mrf.mxu0
          %v996 = vpop.f32.mrf.mxu0
          %v997 = vpop.f32.mrf.mxu0
          %998 = vdwg.mxu0
          %v999 = vadd.f32 %v954, %v994
          %1000 = vst.msk [vmem:[%s466] sm:$0xf] %vm949, %v999
          %v1001 = vlaneseq
          %v1002 = vand.u32 %v1001, 127
          %vm1003 = vcmp.lt.s32.totalorder %v1002, 16
          %v1004 = vmul.f32 %v920, %v920
          %v1005 = vmul.f32 %v921, %v921
          %v1006 = vmul.f32 %v922, %v922
          %v1007 = vmul.f32 %v923, %v923
          %v1008 = vsel %vm924, %v1004, 0.0
          %1009 = vadd.xlane.f32.xlu0 %v1008
          %v1010 = vpop.xlane.xlu0 %1009
          %v1011 = vsel %vm924, %v1005, 0.0
          %1012 = vadd.xlane.f32.xlu0 %v1011
          %v1013 = vpop.xlane.xlu0 %1012
          %v1014 = vsel %vm924, %v1006, 0.0
          %1015 = vadd.xlane.f32.xlu0 %v1014
          %v1016 = vpop.xlane.xlu0 %1015
          %v1017 = vsel %vm924, %v1007, 0.0
          %1018 = vadd.xlane.f32.xlu0 %v1017
          %v1019 = vpop.xlane.xlu0 %1018
          %v1020 = vadd.f32 %v1010, 1e-12
          %v1021 = vadd.f32 %v1013, 1e-12
          %v1022 = vadd.f32 %v1016, 1e-12
          %v1023 = vadd.f32 %v1019, 1e-12
          %v1024 = vrsqrt.pop %v1020
          %v1025 = vrsqrt.pop %v1021
          %v1026 = vrsqrt.pop %v1022
          %v1027 = vrsqrt.pop %v1023
          %v1028 = vmul.f32 %v920, %v1024
          %v1029 = vmul.f32 %v921, %v1025
          %v1030 = vmul.f32 %v922, %v1026
          %v1031 = vmul.f32 %v923, %v1027
          %v1032 = vld [vmem:[%s512] sm:$0xf]
          %v1033 = vld [vmem:[%s512 + $0x4] sm:$0xf]
          %v1034 = vld [vmem:[%s512 + $0x8] sm:$0xf]
          %v1035 = vld [vmem:[%s512 + $0xc] sm:$0xf]
          %v1036 = vld [vmem:[%s512 + $0x10] sm:$0xf]
          %v1037 = vld [vmem:[%s512 + $0x14] sm:$0xf]
          %v1038 = vld [vmem:[%s512 + $0x18] sm:$0xf]
          %v1039 = vld [vmem:[%s512 + $0x1c] sm:$0xf]
          %v1040 = vld [vmem:[%s512 + $0x20] sm:$0xf]
          %v1041 = vld [vmem:[%s512 + $0x24] sm:$0xf]
          %v1042 = vld [vmem:[%s512 + $0x28] sm:$0xf]
          %v1043 = vld [vmem:[%s512 + $0x2c] sm:$0xf]
          %v1044 = vld [vmem:[%s512 + $0x30] sm:$0xf]
          %v1045 = vld [vmem:[%s512 + $0x34] sm:$0xf]
          %v1046 = vld [vmem:[%s512 + $0x38] sm:$0xf]
          %v1047 = vld [vmem:[%s512 + $0x3c] sm:$0xf]
          %v1048 = vpack.c.bf16 %v1029, %v1028
          %v1049 = vpack.c.bf16 %v1031, %v1030
          %v1066 = vunpack.c.l.b16 %v1032
          %v1067 = vunpack.c.l.b16 %v1033
          %v1068 = vunpack.c.l.b16 %v1034
          %v1069 = vunpack.c.l.b16 %v1035
          %v1070 = vunpack.c.l.b16 %v1036
          %v1071 = vunpack.c.l.b16 %v1037
          %v1072 = vunpack.c.l.b16 %v1038
          %v1073 = vunpack.c.l.b16 %v1039
          %v1074 = vunpack.c.l.b16 %v1040
          %v1075 = vunpack.c.l.b16 %v1041
          %v1076 = vunpack.c.l.b16 %v1042
          %v1077 = vunpack.c.l.b16 %v1043
          %v1078 = vunpack.c.l.b16 %v1044
          %v1079 = vunpack.c.l.b16 %v1045
          %v1080 = vunpack.c.l.b16 %v1046
          %v1081 = vunpack.c.l.b16 %v1047
          %v1082 = vpack.c.b16 %v1067, %v1066
          %v1083 = vpack.c.b16 %v1069, %v1068
          %v1084 = vpack.c.b16 %v1071, %v1070
          %v1085 = vpack.c.b16 %v1073, %v1072
          %v1086 = vpack.c.b16 %v1075, %v1074
          %v1087 = vpack.c.b16 %v1077, %v1076
          %v1088 = vpack.c.b16 %v1079, %v1078
          %v1089 = vpack.c.b16 %v1081, %v1080
          %v1091 = vsel %vm924, %v1048, 0
          %v1094 = vsel %vm924, %v1049, 0
          %v1097 = vsel %vm924, %v1082, 0
          %v1100 = vsel %vm924, %v1083, 0
          %v1103 = vsel %vm924, %v1084, 0
          %v1106 = vsel %vm924, %v1085, 0
          %v1109 = vsel %vm924, %v1086, 0
          %v1112 = vsel %vm924, %v1087, 0
          %v1115 = vsel %vm924, %v1088, 0
          %v1118 = vsel %vm924, %v1089, 0
          %1120 = vmatprep.subr.bf16.mxu0 0
          %1121 = vmatpush1.bf16.xpose.msra.mxu0 %v1118
          %1122 = vmatprep.subr.bf16.mxu0 0
          %1123 = vmatpush1.bf16.xpose.msra.mxu0 %v1115
          %1124 = vmatprep.subr.bf16.mxu0 0
          %1125 = vmatpush1.bf16.xpose.msra.mxu0 %v1112
          %1126 = vmatprep.subr.bf16.mxu0 0
          %1127 = vmatpush1.bf16.xpose.msra.mxu0 %v1109
          %1128 = vmatprep.subr.bf16.mxu0 0
          %1129 = vmatpush1.bf16.xpose.msra.mxu0 %v1106
          %1130 = vmatprep.subr.bf16.mxu0 0
          %1131 = vmatpush1.bf16.xpose.msra.mxu0 %v1103
          %1132 = vmatprep.subr.bf16.mxu0 0
          %1133 = vmatpush1.bf16.xpose.msra.mxu0 %v1100
          %1134 = vmatprep.subr.bf16.mxu0 0
          %1135 = vmatpush1.bf16.xpose.msra.mxu0 %v1097
          %1136 = vmatprep.subr.bf16.mxu0 0
          %1137 = vmatpush2.bf16.xpose.msra.mxu0 0
          %1138 = vmatprep.subr.bf16.mxu0 0
          %1139 = vmatpush2.bf16.xpose.msra.mxu0 0
          %1140 = vmatprep.subr.bf16.mxu0 0
          %1141 = vmatpush2.bf16.xpose.msra.mxu0 0
          %1142 = vmatprep.subr.bf16.mxu0 0
          %1143 = vmatpush2.bf16.xpose.msra.mxu0 0
          %1144 = vmatprep.subr.bf16.mxu0 0
          %1145 = vmatpush2.bf16.xpose.msra.mxu0 0
          %1146 = vmatprep.subr.bf16.mxu0 0
          %1147 = vmatpush2.bf16.xpose.msra.mxu0 0
          %1148 = vmatprep.subr.bf16.mxu0 0
          %1149 = vmatpush2.bf16.xpose.msra.mxu0 0
          %1150 = vmatprep.subr.bf16.mxu0 0
          %1151 = vmatpush2.bf16.xpose.msra.mxu0 0
          %1152 = vmatprep.mubr.bf16.mxu0 0
          %1153 = vmatmul.mubr.bf16.gmra.mxu0 %v1091
          %v1154 = vpop.f32.mrf.mxu0
          %v1155 = vadd.f32 0.0, %v1154
          %v1156 = vpop.f32.mrf.mxu0
          %v1157 = vpop.f32.mrf.mxu0
          %v1158 = vadd.f32 0.0, %v1157
          %v1159 = vpop.f32.mrf.mxu0
          %1160 = vmatprep.mubr.bf16.mxu0 0
          %1161 = vmatmul.mubr.bf16.gmra.mxu0 %v1094
          %v1162 = vpop.f32.mrf.mxu0
          %v1163 = vadd.f32 0.0, %v1162
          %v1164 = vpop.f32.mrf.mxu0
          %v1165 = vpop.f32.mrf.mxu0
          %v1166 = vadd.f32 0.0, %v1165
          %v1167 = vpop.f32.mrf.mxu0
          %1168 = vdwg.mxu0
          %v1169 = vsel %vm1003, 1, 0
          %vm1170 = vcmp.eq.s32.totalorder %v1169, 1
          %v1171 = vsel %vm1170, %v1155, -1e+30
          %v1172 = vsel %vm1170, %v1158, -1e+30
          %v1173 = vsel %vm1170, %v1163, -1e+30
          %v1174 = vsel %vm1170, %v1166, -1e+30
          %1175 = vmax.xlane.f32.xlu0 %v1171
          %v1176 = vpop.xlane.xlu0 %1175
          %1177 = vmax.xlane.f32.xlu0 %v1172
          %v1178 = vpop.xlane.xlu0 %1177
          %1179 = vmax.xlane.f32.xlu0 %v1173
          %v1180 = vpop.xlane.xlu0 %1179
          %1181 = vmax.xlane.f32.xlu0 %v1174
          %v1182 = vpop.xlane.xlu0 %1181
          %vm1183 = vcmp.ge.f32.partialorder %v1171, %v1176
          %vm1184 = vcmp.ge.f32.partialorder %v1172, %v1178
          %vm1185 = vcmp.ge.f32.partialorder %v1173, %v1180
          %vm1186 = vcmp.ge.f32.partialorder %v1174, %v1182
          %v1187 = vsel %vm1183, %v1002, 128
          %v1188 = vsel %vm1184, %v1002, 128
          %v1189 = vsel %vm1185, %v1002, 128
          %v1190 = vsel %vm1186, %v1002, 128
          %v1191 = vand.u32 %v1187, 65535
          %v1192 = vshra.s32 %v1187, 16
          %v1193 = vcvt.s32.f32 %v1191
          %v1194 = vcvt.s32.f32 %v1192
          %1195 = vmin.xlane.f32.xlu0 %v1194
          %v1196 = vpop.xlane.xlu0 %1195
          %vm1197 = vcmp.eq.f32.partialorder %v1194, %v1196
          %v1198 = vsel %vm1197, %v1193, inf
          %1199 = vmin.xlane.f32.xlu0 %v1198
          %v1200 = vpop.xlane.xlu0 %1199
          %v1201 = vcvt.f32.s32 %v1200
          %v1202 = vcvt.f32.s32 %v1196
          %v1203 = vshll.u32 %v1202, 16
          %v1204 = vadd.s32 %v1203, %v1201
          %v1205 = vand.u32 %v1188, 65535
          %v1206 = vshra.s32 %v1188, 16
          %v1207 = vcvt.s32.f32 %v1205
          %v1208 = vcvt.s32.f32 %v1206
          %1209 = vmin.xlane.f32.xlu0 %v1208
          %v1210 = vpop.xlane.xlu0 %1209
          %vm1211 = vcmp.eq.f32.partialorder %v1208, %v1210
          %v1212 = vsel %vm1211, %v1207, inf
          %1213 = vmin.xlane.f32.xlu0 %v1212
          %v1214 = vpop.xlane.xlu0 %1213
          %v1215 = vcvt.f32.s32 %v1214
          %v1216 = vcvt.f32.s32 %v1210
          %v1217 = vshll.u32 %v1216, 16
          %v1218 = vadd.s32 %v1217, %v1215
          %v1219 = vand.u32 %v1189, 65535
          %v1220 = vshra.s32 %v1189, 16
          %v1221 = vcvt.s32.f32 %v1219
          %v1222 = vcvt.s32.f32 %v1220
          %1223 = vmin.xlane.f32.xlu0 %v1222
          %v1224 = vpop.xlane.xlu0 %1223
          %vm1225 = vcmp.eq.f32.partialorder %v1222, %v1224
          %v1226 = vsel %vm1225, %v1221, inf
          %1227 = vmin.xlane.f32.xlu0 %v1226
          %v1228 = vpop.xlane.xlu0 %1227
          %v1229 = vcvt.f32.s32 %v1228
          %v1230 = vcvt.f32.s32 %v1224
          %v1231 = vshll.u32 %v1230, 16
          %v1232 = vadd.s32 %v1231, %v1229
          %v1233 = vand.u32 %v1190, 65535
          %v1234 = vshra.s32 %v1190, 16
          %v1235 = vcvt.s32.f32 %v1233
          %v1236 = vcvt.s32.f32 %v1234
          %1237 = vmin.xlane.f32.xlu0 %v1236
          %v1238 = vpop.xlane.xlu0 %1237
          %vm1239 = vcmp.eq.f32.partialorder %v1236, %v1238
          %v1240 = vsel %vm1239, %v1235, inf
          %1241 = vmin.xlane.f32.xlu0 %v1240
          %v1242 = vpop.xlane.xlu0 %1241
          %v1243 = vcvt.f32.s32 %v1242
          %v1244 = vcvt.f32.s32 %v1238
          %v1245 = vshll.u32 %v1244, 16
          %v1246 = vadd.s32 %v1245, %v1243
          %vm1247 = vcmp.eq.s32.totalorder %v1002, %v1204
          %vm1248 = vcmp.eq.s32.totalorder %v1002, %v1218
          %vm1249 = vcmp.eq.s32.totalorder %v1002, %v1232
          %vm1250 = vcmp.eq.s32.totalorder %v1002, %v1246
          %v1251 = vsel %vm1247, 1, 0
          %v1252 = vsel %vm1248, 1, 0
          %v1253 = vsel %vm1249, 1, 0
          %v1254 = vsel %vm1250, 1, 0
          %v1255 = vcvt.s32.f32 %v1251
          %v1256 = vcvt.s32.f32 %v1252
          %v1257 = vcvt.s32.f32 %v1253
          %v1258 = vcvt.s32.f32 %v1254
          %v1259 = vpack.c.bf16 %v1256, %v1255
          %v1260 = vpack.c.bf16 %v1258, %v1257
          %1269 = vmatprep.subr.bf16.mxu0 0
          %1270 = vmatpush1.bf16.msra.mxu0 %v1089
          %1271 = vmatprep.subr.bf16.mxu0 0
          %1272 = vmatpush1.bf16.msra.mxu0 %v1088
          %1273 = vmatprep.subr.bf16.mxu0 0
          %1274 = vmatpush1.bf16.msra.mxu0 %v1087
          %1275 = vmatprep.subr.bf16.mxu0 0
          %1276 = vmatpush1.bf16.msra.mxu0 %v1086
          %1277 = vmatprep.subr.bf16.mxu0 0
          %1278 = vmatpush1.bf16.msra.mxu0 %v1085
          %1279 = vmatprep.subr.bf16.mxu0 0
          %1280 = vmatpush1.bf16.msra.mxu0 %v1084
          %1281 = vmatprep.subr.bf16.mxu0 0
          %1282 = vmatpush1.bf16.msra.mxu0 %v1083
          %1283 = vmatprep.subr.bf16.mxu0 0
          %1284 = vmatpush1.bf16.msra.mxu0 %v1082
          %1285 = vmatprep.subr.bf16.mxu0 0
          %1286 = vmatpush2.bf16.msra.mxu0 0
          %1287 = vmatprep.subr.bf16.mxu0 0
          %1288 = vmatpush2.bf16.msra.mxu0 0
          %1289 = vmatprep.subr.bf16.mxu0 0
          %1290 = vmatpush2.bf16.msra.mxu0 0
          %1291 = vmatprep.subr.bf16.mxu0 0
          %1292 = vmatpush2.bf16.msra.mxu0 0
          %1293 = vmatprep.subr.bf16.mxu0 0
          %1294 = vmatpush2.bf16.msra.mxu0 0
          %1295 = vmatprep.subr.bf16.mxu0 0
          %1296 = vmatpush2.bf16.msra.mxu0 0
          %1297 = vmatprep.subr.bf16.mxu0 0
          %1298 = vmatpush2.bf16.msra.mxu0 0
          %1299 = vmatprep.subr.bf16.mxu0 0
          %1300 = vmatpush2.bf16.msra.mxu0 0
          %1301 = vmatprep.mubr.bf16.mxu0 0
          %1302 = vmatmul.mubr.bf16.gmra.mxu0 %v1259
          %v1303 = vpop.f32.mrf.mxu0
          %v1304 = vadd.f32 0.0, %v1303
          %v1305 = vpop.f32.mrf.mxu0
          %v1306 = vpop.f32.mrf.mxu0
          %v1307 = vadd.f32 0.0, %v1306
          %v1308 = vpop.f32.mrf.mxu0
          %1309 = vmatprep.mubr.bf16.mxu0 0
          %1310 = vmatmul.mubr.bf16.gmra.mxu0 %v1260
          %v1311 = vpop.f32.mrf.mxu0
          %v1312 = vadd.f32 0.0, %v1311
          %v1313 = vpop.f32.mrf.mxu0
          %v1314 = vpop.f32.mrf.mxu0
          %v1315 = vadd.f32 0.0, %v1314
          %v1316 = vpop.f32.mrf.mxu0
          %1317 = vdwg.mxu0
          %v1318 = vsub.f32 %v1304, %v920
          %v1319 = vsub.f32 %v1307, %v921
          %v1320 = vsub.f32 %v1312, %v922
          %v1321 = vsub.f32 %v1315, %v923
          %v1322 = vmul.f32 %v1318, %v544
          %v1323 = vmul.f32 %v1319, %v545
          %v1324 = vmul.f32 %v1320, %v546
          %v1325 = vmul.f32 %v1321, %v547
          %v1326 = vmul.f32 %v1322, %v1322
          %v1327 = vmul.f32 %v1323, %v1323
          %v1328 = vmul.f32 %v1324, %v1324
          %v1329 = vmul.f32 %v1325, %v1325
          %v1330 = vsel %vm924, %v1326, 0.0
          %v1331 = vsel %vm924, %v1327, 0.0
          %v1332 = vadd.f32 %v1330, %v1331
          %v1333 = vsel %vm924, %v1328, 0.0
          %v1334 = vadd.f32 %v1332, %v1333
          %v1335 = vsel %vm924, %v1329, 0.0
          %v1336 = vadd.f32 %v1334, %v1335
          %1337 = vadd.xlane.f32.xlu0 %v1336
          %v1338 = vpop.xlane.xlu0 %1337
          %v1339 = vrot.slane %v1338, 4
          %v1340 = vadd.f32 %v1338, %v1339
          %v1341 = vrot.slane %v1340, 2
          %v1342 = vadd.f32 %v1340, %v1341
          %v1343 = vrot.slane %v1342, 1
          %v1344 = vadd.f32 %v1342, %v1343
          %s1345 = vtos %v1344
          %s1346 = sadd.f32 %s1345, 0.0
          %v1347 = vsub.f32 %v920, %v1304
          %v1348 = vsub.f32 %v921, %v1307
          %v1349 = vsub.f32 %v922, %v1312
          %v1350 = vsub.f32 %v923, %v1315
          %v1351 = vmul.f32 %v1347, %v1347
          %v1352 = vmul.f32 %v1348, %v1348
          %v1353 = vmul.f32 %v1349, %v1349
          %v1354 = vmul.f32 %v1350, %v1350
          %v1355 = vsel %vm924, %v1351, 0.0
          %1356 = vadd.xlane.f32.xlu0 %v1355
          %v1357 = vpop.xlane.xlu0 %1356
          %v1358 = vsel %vm924, %v1352, 0.0
          %1359 = vadd.xlane.f32.xlu0 %v1358
          %v1360 = vpop.xlane.xlu0 %1359
          %v1361 = vsel %vm924, %v1353, 0.0
          %1362 = vadd.xlane.f32.xlu0 %v1361
          %v1363 = vpop.xlane.xlu0 %1362
          %v1364 = vsel %vm924, %v1354, 0.0
          %1365 = vadd.xlane.f32.xlu0 %v1364
          %v1366 = vpop.xlane.xlu0 %1365
          %v1367 = vadd.f32 %v1357, 1e-12
          %v1368 = vadd.f32 %v1360, 1e-12
          %v1369 = vadd.f32 %v1363, 1e-12
          %v1370 = vadd.f32 %v1366, 1e-12
          %v1371 = vrsqrt.pop %v1367
          %v1372 = vrsqrt.pop %v1368
          %v1373 = vrsqrt.pop %v1369
          %v1374 = vrsqrt.pop %v1370
          %v1375 = vmul.f32 %v1347, %v1371
          %v1376 = vmul.f32 %v1348, %v1372
          %v1377 = vmul.f32 %v1349, %v1373
          %v1378 = vmul.f32 %v1350, %v1374
          %s1379 = scalar_lea.vmem %s512, 64
          %v1380 = vld [vmem:[%s1379] sm:$0xf]
          %v1381 = vld [vmem:[%s1379 + $0x4] sm:$0xf]
          %v1382 = vld [vmem:[%s1379 + $0x8] sm:$0xf]
          %v1383 = vld [vmem:[%s1379 + $0xc] sm:$0xf]
          %v1384 = vld [vmem:[%s1379 + $0x10] sm:$0xf]
          %v1385 = vld [vmem:[%s1379 + $0x14] sm:$0xf]
          %v1386 = vld [vmem:[%s1379 + $0x18] sm:$0xf]
          %v1387 = vld [vmem:[%s1379 + $0x1c] sm:$0xf]
          %v1388 = vld [vmem:[%s1379 + $0x20] sm:$0xf]
          %v1389 = vld [vmem:[%s1379 + $0x24] sm:$0xf]
          %v1390 = vld [vmem:[%s1379 + $0x28] sm:$0xf]
          %v1391 = vld [vmem:[%s1379 + $0x2c] sm:$0xf]
          %v1392 = vld [vmem:[%s1379 + $0x30] sm:$0xf]
          %v1393 = vld [vmem:[%s1379 + $0x34] sm:$0xf]
          %v1394 = vld [vmem:[%s1379 + $0x38] sm:$0xf]
          %v1395 = vld [vmem:[%s1379 + $0x3c] sm:$0xf]
          %v1396 = vpack.c.bf16 %v1376, %v1375
          %v1397 = vpack.c.bf16 %v1378, %v1377
          %v1414 = vunpack.c.l.b16 %v1380
          %v1415 = vunpack.c.l.b16 %v1381
          %v1416 = vunpack.c.l.b16 %v1382
          %v1417 = vunpack.c.l.b16 %v1383
          %v1418 = vunpack.c.l.b16 %v1384
          %v1419 = vunpack.c.l.b16 %v1385
          %v1420 = vunpack.c.l.b16 %v1386
          %v1421 = vunpack.c.l.b16 %v1387
          %v1422 = vunpack.c.l.b16 %v1388
          %v1423 = vunpack.c.l.b16 %v1389
          %v1424 = vunpack.c.l.b16 %v1390
          %v1425 = vunpack.c.l.b16 %v1391
          %v1426 = vunpack.c.l.b16 %v1392
          %v1427 = vunpack.c.l.b16 %v1393
          %v1428 = vunpack.c.l.b16 %v1394
          %v1429 = vunpack.c.l.b16 %v1395
          %v1430 = vpack.c.b16 %v1415, %v1414
          %v1431 = vpack.c.b16 %v1417, %v1416
          %v1432 = vpack.c.b16 %v1419, %v1418
          %v1433 = vpack.c.b16 %v1421, %v1420
          %v1434 = vpack.c.b16 %v1423, %v1422
          %v1435 = vpack.c.b16 %v1425, %v1424
          %v1436 = vpack.c.b16 %v1427, %v1426
          %v1437 = vpack.c.b16 %v1429, %v1428
          %v1439 = vsel %vm924, %v1396, 0
          %v1442 = vsel %vm924, %v1397, 0
          %v1445 = vsel %vm924, %v1430, 0
          %v1448 = vsel %vm924, %v1431, 0
          %v1451 = vsel %vm924, %v1432, 0
          %v1454 = vsel %vm924, %v1433, 0
          %v1457 = vsel %vm924, %v1434, 0
          %v1460 = vsel %vm924, %v1435, 0
          %v1463 = vsel %vm924, %v1436, 0
          %v1466 = vsel %vm924, %v1437, 0
          %1468 = vmatprep.subr.bf16.mxu0 0
          %1469 = vmatpush1.bf16.xpose.msra.mxu0 %v1466
          %1470 = vmatprep.subr.bf16.mxu0 0
          %1471 = vmatpush1.bf16.xpose.msra.mxu0 %v1463
          %1472 = vmatprep.subr.bf16.mxu0 0
          %1473 = vmatpush1.bf16.xpose.msra.mxu0 %v1460
          %1474 = vmatprep.subr.bf16.mxu0 0
          %1475 = vmatpush1.bf16.xpose.msra.mxu0 %v1457
          %1476 = vmatprep.subr.bf16.mxu0 0
          %1477 = vmatpush1.bf16.xpose.msra.mxu0 %v1454
          %1478 = vmatprep.subr.bf16.mxu0 0
          %1479 = vmatpush1.bf16.xpose.msra.mxu0 %v1451
          %1480 = vmatprep.subr.bf16.mxu0 0
          %1481 = vmatpush1.bf16.xpose.msra.mxu0 %v1448
          %1482 = vmatprep.subr.bf16.mxu0 0
          %1483 = vmatpush1.bf16.xpose.msra.mxu0 %v1445
          %1484 = vmatprep.subr.bf16.mxu0 0
          %1485 = vmatpush2.bf16.xpose.msra.mxu0 0
          %1486 = vmatprep.subr.bf16.mxu0 0
          %1487 = vmatpush2.bf16.xpose.msra.mxu0 0
          %1488 = vmatprep.subr.bf16.mxu0 0
          %1489 = vmatpush2.bf16.xpose.msra.mxu0 0
          %1490 = vmatprep.subr.bf16.mxu0 0
          %1491 = vmatpush2.bf16.xpose.msra.mxu0 0
          %1492 = vmatprep.subr.bf16.mxu0 0
          %1493 = vmatpush2.bf16.xpose.msra.mxu0 0
          %1494 = vmatprep.subr.bf16.mxu0 0
          %1495 = vmatpush2.bf16.xpose.msra.mxu0 0
          %1496 = vmatprep.subr.bf16.mxu0 0
          %1497 = vmatpush2.bf16.xpose.msra.mxu0 0
          %1498 = vmatprep.subr.bf16.mxu0 0
          %1499 = vmatpush2.bf16.xpose.msra.mxu0 0
          %1500 = vmatprep.mubr.bf16.mxu0 0
          %1501 = vmatmul.mubr.bf16.gmra.mxu0 %v1439
          %v1502 = vpop.f32.mrf.mxu0
          %v1503 = vadd.f32 0.0, %v1502
          %v1504 = vpop.f32.mrf.mxu0
          %v1505 = vpop.f32.mrf.mxu0
          %v1506 = vadd.f32 0.0, %v1505
          %v1507 = vpop.f32.mrf.mxu0
          %1508 = vmatprep.mubr.bf16.mxu0 0
          %1509 = vmatmul.mubr.bf16.gmra.mxu0 %v1442
          %v1510 = vpop.f32.mrf.mxu0
          %v1511 = vadd.f32 0.0, %v1510
          %v1512 = vpop.f32.mrf.mxu0
          %v1513 = vpop.f32.mrf.mxu0
          %v1514 = vadd.f32 0.0, %v1513
          %v1515 = vpop.f32.mrf.mxu0
          %1516 = vdwg.mxu0
          %v1517 = vsel %vm1170, %v1503, -1e+30
          %v1518 = vsel %vm1170, %v1506, -1e+30
          %v1519 = vsel %vm1170, %v1511, -1e+30
          %v1520 = vsel %vm1170, %v1514, -1e+30
          %1521 = vmax.xlane.f32.xlu0 %v1517
          %v1522 = vpop.xlane.xlu0 %1521
          %1523 = vmax.xlane.f32.xlu0 %v1518
          %v1524 = vpop.xlane.xlu0 %1523
          %1525 = vmax.xlane.f32.xlu0 %v1519
          %v1526 = vpop.xlane.xlu0 %1525
          %1527 = vmax.xlane.f32.xlu0 %v1520
          %v1528 = vpop.xlane.xlu0 %1527
          %vm1529 = vcmp.ge.f32.partialorder %v1517, %v1522
          %vm1530 = vcmp.ge.f32.partialorder %v1518, %v1524
          %vm1531 = vcmp.ge.f32.partialorder %v1519, %v1526
          %vm1532 = vcmp.ge.f32.partialorder %v1520, %v1528
          %v1533 = vsel %vm1529, %v1002, 128
          %v1534 = vsel %vm1530, %v1002, 128
          %v1535 = vsel %vm1531, %v1002, 128
          %v1536 = vsel %vm1532, %v1002, 128
          %v1537 = vand.u32 %v1533, 65535
          %v1538 = vshra.s32 %v1533, 16
          %v1539 = vcvt.s32.f32 %v1537
          %v1540 = vcvt.s32.f32 %v1538
          %1541 = vmin.xlane.f32.xlu0 %v1540
          %v1542 = vpop.xlane.xlu0 %1541
          %vm1543 = vcmp.eq.f32.partialorder %v1540, %v1542
          %v1544 = vsel %vm1543, %v1539, inf
          %1545 = vmin.xlane.f32.xlu0 %v1544
          %v1546 = vpop.xlane.xlu0 %1545
          %v1547 = vcvt.f32.s32 %v1546
          %v1548 = vcvt.f32.s32 %v1542
          %v1549 = vshll.u32 %v1548, 16
          %v1550 = vadd.s32 %v1549, %v1547
          %v1551 = vand.u32 %v1534, 65535
          %v1552 = vshra.s32 %v1534, 16
          %v1553 = vcvt.s32.f32 %v1551
          %v1554 = vcvt.s32.f32 %v1552
          %1555 = vmin.xlane.f32.xlu0 %v1554
          %v1556 = vpop.xlane.xlu0 %1555
          %vm1557 = vcmp.eq.f32.partialorder %v1554, %v1556
          %v1558 = vsel %vm1557, %v1553, inf
          %1559 = vmin.xlane.f32.xlu0 %v1558
          %v1560 = vpop.xlane.xlu0 %1559
          %v1561 = vcvt.f32.s32 %v1560
          %v1562 = vcvt.f32.s32 %v1556
          %v1563 = vshll.u32 %v1562, 16
          %v1564 = vadd.s32 %v1563, %v1561
          %v1565 = vand.u32 %v1535, 65535
          %v1566 = vshra.s32 %v1535, 16
          %v1567 = vcvt.s32.f32 %v1565
          %v1568 = vcvt.s32.f32 %v1566
          %1569 = vmin.xlane.f32.xlu0 %v1568
          %v1570 = vpop.xlane.xlu0 %1569
          %vm1571 = vcmp.eq.f32.partialorder %v1568, %v1570
          %v1572 = vsel %vm1571, %v1567, inf
          %1573 = vmin.xlane.f32.xlu0 %v1572
          %v1574 = vpop.xlane.xlu0 %1573
          %v1575 = vcvt.f32.s32 %v1574
          %v1576 = vcvt.f32.s32 %v1570
          %v1577 = vshll.u32 %v1576, 16
          %v1578 = vadd.s32 %v1577, %v1575
          %v1579 = vand.u32 %v1536, 65535
          %v1580 = vshra.s32 %v1536, 16
          %v1581 = vcvt.s32.f32 %v1579
          %v1582 = vcvt.s32.f32 %v1580
          %1583 = vmin.xlane.f32.xlu0 %v1582
          %v1584 = vpop.xlane.xlu0 %1583
          %vm1585 = vcmp.eq.f32.partialorder %v1582, %v1584
          %v1586 = vsel %vm1585, %v1581, inf
          %1587 = vmin.xlane.f32.xlu0 %v1586
          %v1588 = vpop.xlane.xlu0 %1587
          %v1589 = vcvt.f32.s32 %v1588
          %v1590 = vcvt.f32.s32 %v1584
          %v1591 = vshll.u32 %v1590, 16
          %v1592 = vadd.s32 %v1591, %v1589
          %vm1593 = vcmp.eq.s32.totalorder %v1002, %v1550
          %vm1594 = vcmp.eq.s32.totalorder %v1002, %v1564
          %vm1595 = vcmp.eq.s32.totalorder %v1002, %v1578
          %vm1596 = vcmp.eq.s32.totalorder %v1002, %v1592
          %v1597 = vsel %vm1593, 1, 0
          %v1598 = vsel %vm1594, 1, 0
          %v1599 = vsel %vm1595, 1, 0
          %v1600 = vsel %vm1596, 1, 0
          %v1601 = vcvt.s32.f32 %v1597
          %v1602 = vcvt.s32.f32 %v1598
          %v1603 = vcvt.s32.f32 %v1599
          %v1604 = vcvt.s32.f32 %v1600
          %v1605 = vpack.c.bf16 %v1602, %v1601
          %v1606 = vpack.c.bf16 %v1604, %v1603
          %1615 = vmatprep.subr.bf16.mxu0 0
          %1616 = vmatpush1.bf16.msra.mxu0 %v1437
          %1617 = vmatprep.subr.bf16.mxu0 0
          %1618 = vmatpush1.bf16.msra.mxu0 %v1436
          %1619 = vmatprep.subr.bf16.mxu0 0
          %1620 = vmatpush1.bf16.msra.mxu0 %v1435
          %1621 = vmatprep.subr.bf16.mxu0 0
          %1622 = vmatpush1.bf16.msra.mxu0 %v1434
          %1623 = vmatprep.subr.bf16.mxu0 0
          %1624 = vmatpush1.bf16.msra.mxu0 %v1433
          %1625 = vmatprep.subr.bf16.mxu0 0
          %1626 = vmatpush1.bf16.msra.mxu0 %v1432
          %1627 = vmatprep.subr.bf16.mxu0 0
          %1628 = vmatpush1.bf16.msra.mxu0 %v1431
          %1629 = vmatprep.subr.bf16.mxu0 0
          %1630 = vmatpush1.bf16.msra.mxu0 %v1430
          %1631 = vmatprep.subr.bf16.mxu0 0
          %1632 = vmatpush2.bf16.msra.mxu0 0
          %1633 = vmatprep.subr.bf16.mxu0 0
          %1634 = vmatpush2.bf16.msra.mxu0 0
          %1635 = vmatprep.subr.bf16.mxu0 0
          %1636 = vmatpush2.bf16.msra.mxu0 0
          %1637 = vmatprep.subr.bf16.mxu0 0
          %1638 = vmatpush2.bf16.msra.mxu0 0
          %1639 = vmatprep.subr.bf16.mxu0 0
          %1640 = vmatpush2.bf16.msra.mxu0 0
          %1641 = vmatprep.subr.bf16.mxu0 0
          %1642 = vmatpush2.bf16.msra.mxu0 0
          %1643 = vmatprep.subr.bf16.mxu0 0
          %1644 = vmatpush2.bf16.msra.mxu0 0
          %1645 = vmatprep.subr.bf16.mxu0 0
          %1646 = vmatpush2.bf16.msra.mxu0 0
          %1647 = vmatprep.mubr.bf16.mxu0 0
          %1648 = vmatmul.mubr.bf16.gmra.mxu0 %v1605
          %v1649 = vpop.f32.mrf.mxu0
          %v1650 = vadd.f32 0.0, %v1649
          %v1651 = vpop.f32.mrf.mxu0
          %v1652 = vpop.f32.mrf.mxu0
          %v1653 = vadd.f32 0.0, %v1652
          %v1654 = vpop.f32.mrf.mxu0
          %1655 = vmatprep.mubr.bf16.mxu0 0
          %1656 = vmatmul.mubr.bf16.gmra.mxu0 %v1606
          %v1657 = vpop.f32.mrf.mxu0
          %v1658 = vadd.f32 0.0, %v1657
          %v1659 = vpop.f32.mrf.mxu0
          %v1660 = vpop.f32.mrf.mxu0
          %v1661 = vadd.f32 0.0, %v1660
          %v1662 = vpop.f32.mrf.mxu0
          %1663 = vdwg.mxu0
          %v1664 = vsub.f32 %v1650, %v1347
          %v1665 = vsub.f32 %v1653, %v1348
          %v1666 = vsub.f32 %v1658, %v1349
          %v1667 = vsub.f32 %v1661, %v1350
          %v1668 = vmul.f32 %v1664, %v544
          %v1669 = vmul.f32 %v1665, %v545
          %v1670 = vmul.f32 %v1666, %v546
          %v1671 = vmul.f32 %v1667, %v547
          %v1672 = vmul.f32 %v1668, %v1668
          %v1673 = vmul.f32 %v1669, %v1669
          %v1674 = vmul.f32 %v1670, %v1670
          %v1675 = vmul.f32 %v1671, %v1671
          %v1676 = vsel %vm924, %v1672, 0.0
          %v1677 = vsel %vm924, %v1673, 0.0
          %v1678 = vadd.f32 %v1676, %v1677
          %v1679 = vsel %vm924, %v1674, 0.0
          %v1680 = vadd.f32 %v1678, %v1679
          %v1681 = vsel %vm924, %v1675, 0.0
          %v1682 = vadd.f32 %v1680, %v1681
          %1683 = vadd.xlane.f32.xlu0 %v1682
          %v1684 = vpop.xlane.xlu0 %1683
          %v1685 = vrot.slane %v1684, 4
          %v1686 = vadd.f32 %v1684, %v1685
          %v1687 = vrot.slane %v1686, 2
          %v1688 = vadd.f32 %v1686, %v1687
          %v1689 = vrot.slane %v1688, 1
          %v1690 = vadd.f32 %v1688, %v1689
          %s1691 = vtos %v1690
          %s1692 = sadd.f32 %s1346, %s1691
          %v1693 = vsub.f32 %v1347, %v1650
          %v1694 = vsub.f32 %v1348, %v1653
          %v1695 = vsub.f32 %v1349, %v1658
          %v1696 = vsub.f32 %v1350, %v1661
          %v1697 = vmul.f32 %v1693, %v1693
          %v1698 = vmul.f32 %v1694, %v1694
          %v1699 = vmul.f32 %v1695, %v1695
          %v1700 = vmul.f32 %v1696, %v1696
          %v1701 = vsel %vm924, %v1697, 0.0
          %1702 = vadd.xlane.f32.xlu0 %v1701
          %v1703 = vpop.xlane.xlu0 %1702
          %v1704 = vsel %vm924, %v1698, 0.0
          %1705 = vadd.xlane.f32.xlu0 %v1704
          %v1706 = vpop.xlane.xlu0 %1705
          %v1707 = vsel %vm924, %v1699, 0.0
          %1708 = vadd.xlane.f32.xlu0 %v1707
          %v1709 = vpop.xlane.xlu0 %1708
          %v1710 = vsel %vm924, %v1700, 0.0
          %1711 = vadd.xlane.f32.xlu0 %v1710
          %v1712 = vpop.xlane.xlu0 %1711
          %v1713 = vadd.f32 %v1703, 1e-12
          %v1714 = vadd.f32 %v1706, 1e-12
          %v1715 = vadd.f32 %v1709, 1e-12
          %v1716 = vadd.f32 %v1712, 1e-12
          %v1717 = vrsqrt.pop %v1713
          %v1718 = vrsqrt.pop %v1714
          %v1719 = vrsqrt.pop %v1715
          %v1720 = vrsqrt.pop %v1716
          %v1721 = vmul.f32 %v1693, %v1717
          %v1722 = vmul.f32 %v1694, %v1718
          %v1723 = vmul.f32 %v1695, %v1719
          %v1724 = vmul.f32 %v1696, %v1720
          %s1725 = scalar_lea.vmem %s512, 128
          %v1726 = vld [vmem:[%s1725] sm:$0xf]
          %v1727 = vld [vmem:[%s1725 + $0x4] sm:$0xf]
          %v1728 = vld [vmem:[%s1725 + $0x8] sm:$0xf]
          %v1729 = vld [vmem:[%s1725 + $0xc] sm:$0xf]
          %v1730 = vld [vmem:[%s1725 + $0x10] sm:$0xf]
          %v1731 = vld [vmem:[%s1725 + $0x14] sm:$0xf]
          %v1732 = vld [vmem:[%s1725 + $0x18] sm:$0xf]
          %v1733 = vld [vmem:[%s1725 + $0x1c] sm:$0xf]
          %v1734 = vld [vmem:[%s1725 + $0x20] sm:$0xf]
          %v1735 = vld [vmem:[%s1725 + $0x24] sm:$0xf]
          %v1736 = vld [vmem:[%s1725 + $0x28] sm:$0xf]
          %v1737 = vld [vmem:[%s1725 + $0x2c] sm:$0xf]
          %v1738 = vld [vmem:[%s1725 + $0x30] sm:$0xf]
          %v1739 = vld [vmem:[%s1725 + $0x34] sm:$0xf]
          %v1740 = vld [vmem:[%s1725 + $0x38] sm:$0xf]
          %v1741 = vld [vmem:[%s1725 + $0x3c] sm:$0xf]
          %v1742 = vpack.c.bf16 %v1722, %v1721
          %v1743 = vpack.c.bf16 %v1724, %v1723
          %v1760 = vunpack.c.l.b16 %v1726
          %v1761 = vunpack.c.l.b16 %v1727
          %v1762 = vunpack.c.l.b16 %v1728
          %v1763 = vunpack.c.l.b16 %v1729
          %v1764 = vunpack.c.l.b16 %v1730
          %v1765 = vunpack.c.l.b16 %v1731
          %v1766 = vunpack.c.l.b16 %v1732
          %v1767 = vunpack.c.l.b16 %v1733
          %v1768 = vunpack.c.l.b16 %v1734
          %v1769 = vunpack.c.l.b16 %v1735
          %v1770 = vunpack.c.l.b16 %v1736
          %v1771 = vunpack.c.l.b16 %v1737
          %v1772 = vunpack.c.l.b16 %v1738
          %v1773 = vunpack.c.l.b16 %v1739
          %v1774 = vunpack.c.l.b16 %v1740
          %v1775 = vunpack.c.l.b16 %v1741
          %v1776 = vpack.c.b16 %v1761, %v1760
          %v1777 = vpack.c.b16 %v1763, %v1762
          %v1778 = vpack.c.b16 %v1765, %v1764
          %v1779 = vpack.c.b16 %v1767, %v1766
          %v1780 = vpack.c.b16 %v1769, %v1768
          %v1781 = vpack.c.b16 %v1771, %v1770
          %v1782 = vpack.c.b16 %v1773, %v1772
          %v1783 = vpack.c.b16 %v1775, %v1774
          %v1785 = vsel %vm924, %v1742, 0
          %v1788 = vsel %vm924, %v1743, 0
          %v1791 = vsel %vm924, %v1776, 0
          %v1794 = vsel %vm924, %v1777, 0
          %v1797 = vsel %vm924, %v1778, 0
          %v1800 = vsel %vm924, %v1779, 0
          %v1803 = vsel %vm924, %v1780, 0
          %v1806 = vsel %vm924, %v1781, 0
          %v1809 = vsel %vm924, %v1782, 0
          %v1812 = vsel %vm924, %v1783, 0
          %1814 = vmatprep.subr.bf16.mxu0 0
          %1815 = vmatpush1.bf16.xpose.msra.mxu0 %v1812
          %1816 = vmatprep.subr.bf16.mxu0 0
          %1817 = vmatpush1.bf16.xpose.msra.mxu0 %v1809
          %1818 = vmatprep.subr.bf16.mxu0 0
          %1819 = vmatpush1.bf16.xpose.msra.mxu0 %v1806
          %1820 = vmatprep.subr.bf16.mxu0 0
          %1821 = vmatpush1.bf16.xpose.msra.mxu0 %v1803
          %1822 = vmatprep.subr.bf16.mxu0 0
          %1823 = vmatpush1.bf16.xpose.msra.mxu0 %v1800
          %1824 = vmatprep.subr.bf16.mxu0 0
          %1825 = vmatpush1.bf16.xpose.msra.mxu0 %v1797
          %1826 = vmatprep.subr.bf16.mxu0 0
          %1827 = vmatpush1.bf16.xpose.msra.mxu0 %v1794
          %1828 = vmatprep.subr.bf16.mxu0 0
          %1829 = vmatpush1.bf16.xpose.msra.mxu0 %v1791
          %1830 = vmatprep.subr.bf16.mxu0 0
          %1831 = vmatpush2.bf16.xpose.msra.mxu0 0
          %1832 = vmatprep.subr.bf16.mxu0 0
          %1833 = vmatpush2.bf16.xpose.msra.mxu0 0
          %1834 = vmatprep.subr.bf16.mxu0 0
          %1835 = vmatpush2.bf16.xpose.msra.mxu0 0
          %1836 = vmatprep.subr.bf16.mxu0 0
          %1837 = vmatpush2.bf16.xpose.msra.mxu0 0
          %1838 = vmatprep.subr.bf16.mxu0 0
          %1839 = vmatpush2.bf16.xpose.msra.mxu0 0
          %1840 = vmatprep.subr.bf16.mxu0 0
          %1841 = vmatpush2.bf16.xpose.msra.mxu0 0
          %1842 = vmatprep.subr.bf16.mxu0 0
          %1843 = vmatpush2.bf16.xpose.msra.mxu0 0
          %1844 = vmatprep.subr.bf16.mxu0 0
          %1845 = vmatpush2.bf16.xpose.msra.mxu0 0
          %1846 = vmatprep.mubr.bf16.mxu0 0
          %1847 = vmatmul.mubr.bf16.gmra.mxu0 %v1785
          %v1848 = vpop.f32.mrf.mxu0
          %v1849 = vadd.f32 0.0, %v1848
          %v1850 = vpop.f32.mrf.mxu0
          %v1851 = vpop.f32.mrf.mxu0
          %v1852 = vadd.f32 0.0, %v1851
          %v1853 = vpop.f32.mrf.mxu0
          %1854 = vmatprep.mubr.bf16.mxu0 0
          %1855 = vmatmul.mubr.bf16.gmra.mxu0 %v1788
          %v1856 = vpop.f32.mrf.mxu0
          %v1857 = vadd.f32 0.0, %v1856
          %v1858 = vpop.f32.mrf.mxu0
          %v1859 = vpop.f32.mrf.mxu0
          %v1860 = vadd.f32 0.0, %v1859
          %v1861 = vpop.f32.mrf.mxu0
          %1862 = vdwg.mxu0
          %v1863 = vsel %vm1170, %v1849, -1e+30
          %v1864 = vsel %vm1170, %v1852, -1e+30
          %v1865 = vsel %vm1170, %v1857, -1e+30
          %v1866 = vsel %vm1170, %v1860, -1e+30
          %1867 = vmax.xlane.f32.xlu0 %v1863
          %v1868 = vpop.xlane.xlu0 %1867
          %1869 = vmax.xlane.f32.xlu0 %v1864
          %v1870 = vpop.xlane.xlu0 %1869
          %1871 = vmax.xlane.f32.xlu0 %v1865
          %v1872 = vpop.xlane.xlu0 %1871
          %1873 = vmax.xlane.f32.xlu0 %v1866
          %v1874 = vpop.xlane.xlu0 %1873
          %vm1875 = vcmp.ge.f32.partialorder %v1863, %v1868
          %vm1876 = vcmp.ge.f32.partialorder %v1864, %v1870
          %vm1877 = vcmp.ge.f32.partialorder %v1865, %v1872
          %vm1878 = vcmp.ge.f32.partialorder %v1866, %v1874
          %v1879 = vsel %vm1875, %v1002, 128
          %v1880 = vsel %vm1876, %v1002, 128
          %v1881 = vsel %vm1877, %v1002, 128
          %v1882 = vsel %vm1878, %v1002, 128
          %v1883 = vand.u32 %v1879, 65535
          %v1884 = vshra.s32 %v1879, 16
          %v1885 = vcvt.s32.f32 %v1883
          %v1886 = vcvt.s32.f32 %v1884
          %1887 = vmin.xlane.f32.xlu0 %v1886
          %v1888 = vpop.xlane.xlu0 %1887
          %vm1889 = vcmp.eq.f32.partialorder %v1886, %v1888
          %v1890 = vsel %vm1889, %v1885, inf
          %1891 = vmin.xlane.f32.xlu0 %v1890
          %v1892 = vpop.xlane.xlu0 %1891
          %v1893 = vcvt.f32.s32 %v1892
          %v1894 = vcvt.f32.s32 %v1888
          %v1895 = vshll.u32 %v1894, 16
          %v1896 = vadd.s32 %v1895, %v1893
          %v1897 = vand.u32 %v1880, 65535
          %v1898 = vshra.s32 %v1880, 16
          %v1899 = vcvt.s32.f32 %v1897
          %v1900 = vcvt.s32.f32 %v1898
          %1901 = vmin.xlane.f32.xlu0 %v1900
          %v1902 = vpop.xlane.xlu0 %1901
          %vm1903 = vcmp.eq.f32.partialorder %v1900, %v1902
          %v1904 = vsel %vm1903, %v1899, inf
          %1905 = vmin.xlane.f32.xlu0 %v1904
          %v1906 = vpop.xlane.xlu0 %1905
          %v1907 = vcvt.f32.s32 %v1906
          %v1908 = vcvt.f32.s32 %v1902
          %v1909 = vshll.u32 %v1908, 16
          %v1910 = vadd.s32 %v1909, %v1907
          %v1911 = vand.u32 %v1881, 65535
          %v1912 = vshra.s32 %v1881, 16
          %v1913 = vcvt.s32.f32 %v1911
          %v1914 = vcvt.s32.f32 %v1912
          %1915 = vmin.xlane.f32.xlu0 %v1914
          %v1916 = vpop.xlane.xlu0 %1915
          %vm1917 = vcmp.eq.f32.partialorder %v1914, %v1916
          %v1918 = vsel %vm1917, %v1913, inf
          %1919 = vmin.xlane.f32.xlu0 %v1918
          %v1920 = vpop.xlane.xlu0 %1919
          %v1921 = vcvt.f32.s32 %v1920
          %v1922 = vcvt.f32.s32 %v1916
          %v1923 = vshll.u32 %v1922, 16
          %v1924 = vadd.s32 %v1923, %v1921
          %v1925 = vand.u32 %v1882, 65535
          %v1926 = vshra.s32 %v1882, 16
          %v1927 = vcvt.s32.f32 %v1925
          %v1928 = vcvt.s32.f32 %v1926
          %1929 = vmin.xlane.f32.xlu0 %v1928
          %v1930 = vpop.xlane.xlu0 %1929
          %vm1931 = vcmp.eq.f32.partialorder %v1928, %v1930
          %v1932 = vsel %vm1931, %v1927, inf
          %1933 = vmin.xlane.f32.xlu0 %v1932
          %v1934 = vpop.xlane.xlu0 %1933
          %v1935 = vcvt.f32.s32 %v1934
          %v1936 = vcvt.f32.s32 %v1930
          %v1937 = vshll.u32 %v1936, 16
          %v1938 = vadd.s32 %v1937, %v1935
          %vm1939 = vcmp.eq.s32.totalorder %v1002, %v1896
          %vm1940 = vcmp.eq.s32.totalorder %v1002, %v1910
          %vm1941 = vcmp.eq.s32.totalorder %v1002, %v1924
          %vm1942 = vcmp.eq.s32.totalorder %v1002, %v1938
          %v1943 = vsel %vm1939, 1, 0
          %v1944 = vsel %vm1940, 1, 0
          %v1945 = vsel %vm1941, 1, 0
          %v1946 = vsel %vm1942, 1, 0
          %v1947 = vcvt.s32.f32 %v1943
          %v1948 = vcvt.s32.f32 %v1944
          %v1949 = vcvt.s32.f32 %v1945
          %v1950 = vcvt.s32.f32 %v1946
          %v1951 = vpack.c.bf16 %v1948, %v1947
          %v1952 = vpack.c.bf16 %v1950, %v1949
          %1961 = vmatprep.subr.bf16.mxu0 0
          %1962 = vmatpush1.bf16.msra.mxu0 %v1783
          %1963 = vmatprep.subr.bf16.mxu0 0
          %1964 = vmatpush1.bf16.msra.mxu0 %v1782
          %1965 = vmatprep.subr.bf16.mxu0 0
          %1966 = vmatpush1.bf16.msra.mxu0 %v1781
          %1967 = vmatprep.subr.bf16.mxu0 0
          %1968 = vmatpush1.bf16.msra.mxu0 %v1780
          %1969 = vmatprep.subr.bf16.mxu0 0
          %1970 = vmatpush1.bf16.msra.mxu0 %v1779
          %1971 = vmatprep.subr.bf16.mxu0 0
          %1972 = vmatpush1.bf16.msra.mxu0 %v1778
          %1973 = vmatprep.subr.bf16.mxu0 0
          %1974 = vmatpush1.bf16.msra.mxu0 %v1777
          %1975 = vmatprep.subr.bf16.mxu0 0
          %1976 = vmatpush1.bf16.msra.mxu0 %v1776
          %1977 = vmatprep.subr.bf16.mxu0 0
          %1978 = vmatpush2.bf16.msra.mxu0 0
          %1979 = vmatprep.subr.bf16.mxu0 0
          %1980 = vmatpush2.bf16.msra.mxu0 0
          %1981 = vmatprep.subr.bf16.mxu0 0
          %1982 = vmatpush2.bf16.msra.mxu0 0
          %1983 = vmatprep.subr.bf16.mxu0 0
          %1984 = vmatpush2.bf16.msra.mxu0 0
          %1985 = vmatprep.subr.bf16.mxu0 0
          %1986 = vmatpush2.bf16.msra.mxu0 0
          %1987 = vmatprep.subr.bf16.mxu0 0
          %1988 = vmatpush2.bf16.msra.mxu0 0
          %1989 = vmatprep.subr.bf16.mxu0 0
          %1990 = vmatpush2.bf16.msra.mxu0 0
          %1991 = vmatprep.subr.bf16.mxu0 0
          %1992 = vmatpush2.bf16.msra.mxu0 0
          %1993 = vmatprep.mubr.bf16.mxu0 0
          %1994 = vmatmul.mubr.bf16.gmra.mxu0 %v1951
          %v1995 = vpop.f32.mrf.mxu0
          %v1996 = vadd.f32 0.0, %v1995
          %v1997 = vpop.f32.mrf.mxu0
          %v1998 = vpop.f32.mrf.mxu0
          %v1999 = vadd.f32 0.0, %v1998
          %v2000 = vpop.f32.mrf.mxu0
          %2001 = vmatprep.mubr.bf16.mxu0 0
          %2002 = vmatmul.mubr.bf16.gmra.mxu0 %v1952
          %v2003 = vpop.f32.mrf.mxu0
          %v2004 = vadd.f32 0.0, %v2003
          %v2005 = vpop.f32.mrf.mxu0
          %v2006 = vpop.f32.mrf.mxu0
          %v2007 = vadd.f32 0.0, %v2006
          %v2008 = vpop.f32.mrf.mxu0
          %2009 = vdwg.mxu0
          %v2010 = vsub.f32 %v1996, %v1693
          %v2011 = vsub.f32 %v1999, %v1694
          %v2012 = vsub.f32 %v2004, %v1695
          %v2013 = vsub.f32 %v2007, %v1696
          %v2014 = vmul.f32 %v2010, %v544
          %v2015 = vmul.f32 %v2011, %v545
          %v2016 = vmul.f32 %v2012, %v546
          %v2017 = vmul.f32 %v2013, %v547
          %v2018 = vmul.f32 %v2014, %v2014
          %v2019 = vmul.f32 %v2015, %v2015
          %v2020 = vmul.f32 %v2016, %v2016
          %v2021 = vmul.f32 %v2017, %v2017
          %v2022 = vsel %vm924, %v2018, 0.0
          %v2023 = vsel %vm924, %v2019, 0.0
          %v2024 = vadd.f32 %v2022, %v2023
          %v2025 = vsel %vm924, %v2020, 0.0
          %v2026 = vadd.f32 %v2024, %v2025
          %v2027 = vsel %vm924, %v2021, 0.0
          %v2028 = vadd.f32 %v2026, %v2027
          %2029 = vadd.xlane.f32.xlu0 %v2028
          %v2030 = vpop.xlane.xlu0 %2029
          %v2031 = vrot.slane %v2030, 4
          %v2032 = vadd.f32 %v2030, %v2031
          %v2033 = vrot.slane %v2032, 2
          %v2034 = vadd.f32 %v2032, %v2033
          %v2035 = vrot.slane %v2034, 1
          %v2036 = vadd.f32 %v2034, %v2035
          %s2037 = vtos %v2036
          %s2038 = sadd.f32 %s1692, %s2037
          %vm2039 = vcmask 7168
          %v2040 = vsel %vm2039, %v1204, %v1550
          %v2041 = vsel %vm2039, %v1218, %v1564
          %v2042 = vsel %vm2039, %v1232, %v1578
          %v2043 = vsel %vm2039, %v1246, %v1592
          %vm2044 = vcmask 15360
          %v2045 = vsel %vm2044, %v2040, %v1896
          %v2046 = vsel %vm2044, %v2041, %v1910
          %v2047 = vsel %vm2044, %v2042, %v1924
          %v2048 = vsel %vm2044, %v2043, %v1938
          %vm2049 = vcmask 23552
          %2050 = vst.msk [vmem:[%s522] sm:$0xff] %vm2049, %v2045
          %2051 = vst.msk [vmem:[%s522 + $0x8] sm:$0xff] %vm2049, %v2046
          %2052 = vst.msk [vmem:[%s522 + $0x10] sm:$0xff] %vm2049, %v2047
          %2053 = vst.msk [vmem:[%s522 + $0x18] sm:$0xff] %vm2049, %v2048
          %s2054 = sld [smem:[#allocation10]]
          %s2055 = smul.f32 %s2038, 0.25
          %s2056 = smul.f32 %s2055, 0.0009765625
          %s2057 = sadd.f32 %s2054, %s2056
          %s2058 = scalar_lea.smem [#allocation10], 0
          %2059 = sst [smem:[%s2058]] %s2057
        $region64: #{tpu_custom_call.1} parent=47 // pred_fallthru
          _
        %s2060 = sand.u32 %s241, 1
        %s2061 = scalar_lea.sflag [#allocation6], %s2060
        %s2062 = sand.u32 %s241, 1
        %s2063 = smul.addr %s2062, 32
        %s2064 = scalar_lea.vmem [#allocation5], %s2063
        %s2065 = sand.u32 %s267, 1
        %s2066 = scalar_lea.sflag [#allocation9], %s2065
        %s2067 = sand.u32 %s267, 1
        %s2068 = smul.addr %s2067, 4
        %s2069 = scalar_lea.vmem [#allocation8], %s2068
        %s2070 = smul.u32 4, %s36
        %p2071 = scmp.lt.s32.totalorder %s34, 2
        %s2072 = scalar_select %p2071, %s34, 2
        %p2073 = scmp.lt.s32.totalorder %s2070, 3
        %s2074 = scalar_select %p2073, %s2070, 3
        %s2075 = smul.addr %s2072, 4
        %s2076 = sadd.s32 %s2074, %s2075
        %s2077 = smul.addr %s2076, 8
        %s2078 = scalar_lea.vmem %s9, %s2077
        // Predicated region
        $region65: #{tpu_custom_call.1} parent=47 // pred_check
          %p2079 = pneg %p251
        $region66: #{tpu_custom_call.1} parent=47 // pred_check_branch
          %2081 = sbr.rel (%p2079) target = $region68
        $region67: #{tpu_custom_call.1} parent=47 // pred_region
          %s2082 = smul.u32 4, %s36
          %s2084 = ssub.s32 512, 512
          %2085 = vsyncadd %s2061, %s2084
          %s2086 = smul.addr %s34, 4
          %s2087 = sadd.s32 %s2082, %s2086
          %s2088 = smul.addr %s2087, 128
          %s2089 = scalar_lea.hbm %s7, %s2088
          %s2090 = sshll.u32 %s2064, 4
          %s2091 = int_to_ptr.vmem [resolvable:$true] %s2090
          %2096 = dma.vmem_to_hbm [thread:$0]  %s2091, 512, %s2089, %s2061, 128, 128, 8
        $region68: #{tpu_custom_call.1} parent=47 // pred_fallthru
          _
        // Predicated region
        $region69: #{tpu_custom_call.1} parent=47 // pred_check
          %p2097 = pneg %p277
        $region70: #{tpu_custom_call.1} parent=47 // pred_check_branch
          %2099 = sbr.rel (%p2097) target = $region72
        $region71: #{tpu_custom_call.1} parent=47 // pred_region
          %s2101 = ssub.s32 64, 64
          %2102 = vsyncadd %s2066, %s2101
          %s2103 = smul.addr %s34, 64
          %s2104 = scalar_lea.hbm %s8, %s2103
          %s2106 = sshll.u32 %s2069, 4
          %s2107 = int_to_ptr.vmem [resolvable:$true] %s2106
          %2109 = dma.vmem_to_hbm [thread:$0]  %s2107, 64, %s2104, %s2066
        $region72: #{tpu_custom_call.1} parent=47 // pred_fallthru
          _
        // Predicated region
        $region73: #{tpu_custom_call.1} parent=47 // pred_check
          %p2110 = pneg %p305
        $region74: #{tpu_custom_call.1} parent=47 // pred_check_branch
          %2112 = sbr.rel (%p2110) target = $region76
        $region75: #{tpu_custom_call.1} parent=47 // pred_region
          %s2113 = smul.u32 4, %s36
        $region76: #{tpu_custom_call.1} parent=47 // pred_fallthru
          _
        // Predicated region
        $region77: #{tpu_custom_call.1} parent=47 // pred_check
          %p2114 = pneg %p326
        $region78: #{tpu_custom_call.1} parent=47 // pred_check_branch
          %2116 = sbr.rel (%p2114) target = $region80
        $region79: #{tpu_custom_call.1} parent=47 // pred_region
          %s2118 = ssub.s32 16, 16
          %2119 = vsyncadd [#allocation7], %s2118
          %2122 = dma.smem_to_hbm [#allocation10], 16, %s10, [#allocation7]
        $region80: #{tpu_custom_call.1} parent=47 // pred_fallthru
          _
        // Predicated region
        $region81: #{tpu_custom_call.1} parent=47 // pred_check
          %p2123 = pneg %p326
        $region82: #{tpu_custom_call.1} parent=47 // pred_check_branch
          %2125 = sbr.rel (%p2123) target = $region84
        $region83: #{tpu_custom_call.1} parent=47 // pred_region
          %2126 = dma.done [#allocation7], 16
        $region84: #{tpu_custom_call.1} parent=47 // pred_fallthru
          _
        %2127 = sfence
      $region48: #{tpu_custom_call.1} parent=5 // pred_fallthru
        _
      %p2128 = scmp.le.s32.totalorder 2, %s24
      // Predicated region
      $region85: #{tpu_custom_call.1} parent=5 // pred_check
        %p2129 = pneg %p2128
      $region86: #{tpu_custom_call.1} parent=5 // pred_check_branch
        %2131 = sbr.rel (%p2129) target = $region88
      $region87: #{tpu_custom_call.1} parent=5 // pred_region
        %s2132 = ssub.s32 %s24, 2
        // Predicated region
        $region89: #{tpu_custom_call.1} parent=87 // pred_check
          %p2133 = pneg %p257
        $region90: #{tpu_custom_call.1} parent=87 // pred_check_branch
          %2135 = sbr.rel (%p2133) target = $region92
        $region91: #{tpu_custom_call.1} parent=87 // pred_region
          %s2136 = sand.u32 %s242, 1
          %s2137 = scalar_lea.sflag [#allocation6], %s2136
          %s2138 = sand.u32 %s242, 1
          %s2139 = smul.addr %s2138, 32
          %s2140 = scalar_lea.vmem [#allocation5], %s2139
          %2141 = dma.done %s2137, 512
        $region92: #{tpu_custom_call.1} parent=87 // pred_fallthru
          _
        // Predicated region
        $region93: #{tpu_custom_call.1} parent=87 // pred_check
          %p2142 = pneg %p283
        $region94: #{tpu_custom_call.1} parent=87 // pred_check_branch
          %2144 = sbr.rel (%p2142) target = $region96
        $region95: #{tpu_custom_call.1} parent=87 // pred_region
          %s2145 = sand.u32 %s268, 1
          %s2146 = scalar_lea.sflag [#allocation9], %s2145
          %s2147 = sand.u32 %s268, 1
          %s2148 = smul.addr %s2147, 4
          %s2149 = scalar_lea.vmem [#allocation8], %s2148
          %2150 = dma.done %s2146, 64
        $region96: #{tpu_custom_call.1} parent=87 // pred_fallthru
          _
        // Predicated region
        $region97: #{tpu_custom_call.1} parent=87 // pred_check
          %p2151 = pneg %p311
        $region98: #{tpu_custom_call.1} parent=87 // pred_check_branch
          %2153 = sbr.rel (%p2151) target = $region100
        $region99: #{tpu_custom_call.1} parent=87 // pred_region
          %s2154 = smul.u32 4, %s39
          %p2155 = scmp.lt.s32.totalorder %s37, 2
          %s2156 = scalar_select %p2155, %s37, 2
          %p2157 = scmp.lt.s32.totalorder %s2154, 3
          %s2158 = scalar_select %p2157, %s2154, 3
          %s2159 = smul.addr %s2156, 4
          %s2160 = sadd.s32 %s2158, %s2159
          %s2161 = smul.addr %s2160, 8
          %s2162 = scalar_lea.vmem %s9, %s2161
        $region100: #{tpu_custom_call.1} parent=87 // pred_fallthru
          _
      $region88: #{tpu_custom_call.1} parent=5 // pred_fallthru
        _
    $region6: #{tpu_custom_call.1} parent=1 // loop_footer
      %s28 = sadd.s32 1, %s24
    $region7: #{tpu_custom_call.1} parent=1 // loop_footer_branch
      %23 = sbr.rel target = $region3
    $region8: #{tpu_custom_call.1} parent=1 // loop_exit
      _
    %2163 = vsyncpa [#allocation6], 1
    %s2164 = scalar_lea.sflag [#allocation6], 1
    %2165 = vsyncpa %s2164, 1
    %2166 = vsyncpa [#allocation9], 1
    %s2167 = scalar_lea.sflag [#allocation9], 1
    %2168 = vsyncpa %s2167, 1
    %2169 = vsyncpa [#allocation7], 1
    %s2170 = scalar_lea.sflag [#allocation7], 1
    %2171 = vsyncpa %s2170, 1

</llo_original>
